<compile_context>
chip_gen: v7x
topology: tpu7x:2x2x1
jax: 0.10.0
libtpu: 0.0.40
codegen_flags: <defaults>
</compile_context>

<pallas_src>
import functools
import itertools

import numpy as np
import jax
import jax.numpy as jnp
from jax.experimental import pallas as pl
from jax.experimental.pallas import tpu as pltpu


def _round_up(x, m):
    return ((x + m - 1) // m) * m


def _choose_query_tile(n, m_pad, num_classes, extra_out_bytes_per_row):
    """Footprint-driven query-tile selection (replaces fixed 256/512 heuristic)."""
    n16 = _round_up(max(n, 16), 16)          # 16 keeps bf16 side-output blocks packed
    budget = 40 << 20                        # fits v7x's 64 MiB per-TC VMEM w/ headroom
    row_bytes = (2 * m_pad * 4               # f32 cost matrix output, double buffered
                 + 2 * extra_out_bytes_per_row      # optional bf16 cost_class output
                 + 2 * (num_classes + 8) * 4)       # logits + packed box features
    invariant_bytes = (num_classes + 8) * m_pad * 4  # one-hot + target features
    tile = 16
    for cand in (1024, 512, 256, 128, 64, 32, 16):
        if cand * row_bytes + invariant_bytes <= budget:
            tile = cand
            break
    tile = min(tile, n16)
    # v7x megacore: prefer an even grid of >=2 steps so both TensorCores get
    # work, but never shrink the tile below 128 rows just to achieve it.
    steps = -(-n16 // tile)
    while (steps < 2 or steps % 2) and tile > 128:
        tile = _round_up(tile // 2, 16)
        steps = -(-n16 // tile)
    n_pad = _round_up(n16, tile)
    return tile, n_pad


# ----------------------------------------------------------------------------
# Kernel 1: HungarianMatcher cost matrix
# ----------------------------------------------------------------------------
def _hungarian_cost_kernel(logits_ref, feat_ref, onehot_ref, tgt_feat_ref,
                           c_ref, *rest, alpha, gamma, w_class, w_giou, with_cls):
    # logits_ref  : (tile, num_classes) f32
    # feat_ref    : (tile, 8) f32  [w_bbox*cx, w_bbox*cy, w_bbox*w, w_bbox*h, x0, y0, x1, y1]
    # onehot_ref  : (num_classes, Mpad) f32   column one-hot of tgt_ids
    # tgt_feat_ref: (8, Mpad) f32             same packing, transposed
    x = logits_ref[...]
    # One transcendental (exp) shared by sigmoid and both softplus terms.
    e = jnp.exp(-jnp.abs(x))
    inv1pe = 1.0 / (1.0 + e)
    p = jnp.where(x >= 0, inv1pe, e * inv1pe)          # sigmoid(x)
    sp = jnp.maximum(x, 0.0) + jnp.log(1.0 + e)        # softplus(x)  = -log(1-p)
    nlp = sp - x                                       # softplus(-x) = -log(p)
    if gamma == 2.0:                                   # static: no pow / extra EUP
        pos_mod = jnp.square(1.0 - p)
        neg_mod = jnp.square(p)
    else:
        pos_mod = (1.0 - p) ** gamma
        neg_mod = p ** gamma
    # When cost_class is not exported, fold w_class into these constants (free).
    ca = alpha if with_cls else alpha * w_class
    cb = (1.0 - alpha) if with_cls else (1.0 - alpha) * w_class
    pos = ca * pos_mod * nlp
    neg = cb * neg_mod * sp
    # (pos-neg)[:, tgt_ids] == (pos-neg) @ onehot.  f32 MXU matmul: K=num_classes
    # is tiny, and f32 avoids bf16 rounding flipping Hungarian near-ties.
    cost_class = jnp.dot(pos - neg, onehot_ref[...],
                         preferred_element_type=jnp.float32)           # (tile, Mpad)

    b = feat_ref[...]
    t = tgt_feat_ref[...]

    # L1 cdist; w_bbox already folded into the cxcywh columns on host.
    cost_bbox = (jnp.abs(b[:, 0:1] - t[0:1, :]) +
                 jnp.abs(b[:, 1:2] - t[1:2, :]) +
                 jnp.abs(b[:, 2:3] - t[2:3, :]) +
                 jnp.abs(b[:, 3:4] - t[3:4, :]))

    # -generalized_box_iou on precomputed xyxy columns.
    px0, py0, px1, py1 = b[:, 4:5], b[:, 5:6], b[:, 6:7], b[:, 7:8]
    tx0, ty0, tx1, ty1 = t[4:5, :], t[5:6, :], t[6:7, :], t[7:8, :]
    area_p = (px1 - px0) * (py1 - py0)
    area_t = (tx1 - tx0) * (ty1 - ty0)
    inter = (jnp.maximum(jnp.minimum(px1, tx1) - jnp.maximum(px0, tx0), 0.0) *
             jnp.maximum(jnp.minimum(py1, ty1) - jnp.maximum(py0, ty0), 0.0))
    union = area_p + area_t - inter
    inv_union = pl.reciprocal(jnp.maximum(union, 1e-12), approx=True)
    iou = inter * inv_union
    # Enclosing-box extent is >= 0 for any valid (x1>=x0, y1>=y0) boxes: no clamp.
    area_c = ((jnp.maximum(px1, tx1) - jnp.minimum(px0, tx0)) *
              (jnp.maximum(py1, ty1) - jnp.minimum(py0, ty0)))
    inv_area_c = pl.reciprocal(jnp.maximum(area_c, 1e-12), approx=True)
    giou = iou - (area_c - union) * inv_area_c

    cls_term = (w_class * cost_class) if with_cls else cost_class
    c_ref[...] = cost_bbox + cls_term - w_giou * giou
    if with_cls:
        rest[0][...] = cost_class.astype(jnp.bfloat16)


def _compute_cost_matrices(logits, pred_feat, onehot_t, tgt_feat_t, *, alpha, gamma,
                           w_class, w_giou, with_cls, tile, single_buffer_invariants):
    n_pad, num_classes = logits.shape
    m_pad = onehot_t.shape[1]
    assert n_pad % tile == 0
    grid = (n_pad // tile,)

    kernel = functools.partial(_hungarian_cost_kernel, alpha=alpha, gamma=gamma,
                               w_class=w_class, w_giou=w_giou, with_cls=with_cls)

    inv_kwargs = dict(pipeline_mode=pl.Buffered(1)) if single_buffer_invariants else {}
    in_specs = [
        pl.BlockSpec((tile, num_classes), lambda i: (i, 0)),
        pl.BlockSpec((tile, 8), lambda i: (i, 0)),
        # grid-invariant operands: request single buffering (no per-step re-copy)
        pl.BlockSpec((num_classes, m_pad), lambda i: (0, 0), **inv_kwargs),
        pl.BlockSpec((8, m_pad), lambda i: (0, 0), **inv_kwargs),
    ]
    c_struct = jax.ShapeDtypeStruct((n_pad, m_pad), jnp.float32)
    c_spec = pl.BlockSpec((tile, m_pad), lambda i: (i, 0))
    if with_cls:
        out_shape = (c_struct, jax.ShapeDtypeStruct((n_pad, m_pad), jnp.bfloat16))
        out_specs = (c_spec, pl.BlockSpec((tile, m_pad), lambda i: (i, 0)))
    else:
        out_shape = c_struct
        out_specs = c_spec

    # VMEM limit from the real pipelined footprint rather than a fixed number.
    io_bytes = (2 * tile * (num_classes + 8) * 4
                + 2 * tile * m_pad * 4
                + (2 * tile * m_pad * 2 if with_cls else 0)
                + (num_classes + 8) * m_pad * 4 * (1 if single_buffer_invariants else 2))
    vmem_limit = int(min(max(2 * io_bytes, 16 << 20), 64 << 20))

    res = pl.pallas_call(
        kernel,
        out_shape=out_shape,
        grid_spec=pltpu.PrefetchScalarGridSpec(
            num_scalar_prefetch=0, grid=grid,
            in_specs=in_specs, out_specs=out_specs),
        compiler_params=pltpu.CompilerParams(
            dimension_semantics=("parallel",),
            vmem_limit_bytes=vmem_limit),
    )(logits, pred_feat, onehot_t, tgt_feat_t)

    if with_cls:
        return res[0], res[1]
    return res, None


# ----------------------------------------------------------------------------
# Kernel 2: distance_match(..., 'reference') for the whole batch in one shot
# ----------------------------------------------------------------------------
def _ref_match_kernel(ref_ref, tgt_ref, off_ref, end_ref, idx_ref, *, ref_dist_sq):
    # ref_ref : (2, NQpad) f32      reference points, lane-dense over flat queries
    # tgt_ref : (Mpad, 2)  f32      all gt centers (targets on sublanes)
    # off/end : (1, NQpad) int32    per-query valid target row range [off, end)
    # idx_ref : (1, NQpad) int32    matched local gt index or -1
    r = ref_ref[...]
    t = tgt_ref[...]
    off = off_ref[...]
    end = end_ref[...]
    dx = t[:, 0:1] - r[0:1, :]
    dy = t[:, 1:2] - r[1:2, :]
    d2 = dx * dx + dy * dy                               # squared L2 (no sqrt)
    row = jax.lax.broadcasted_iota(jnp.int32, d2.shape, 0)
    valid = (row >= off) & (row < end)
    d2m = jnp.where(valid, d2, jnp.float32(3.0e38))
    min_d2 = jnp.min(d2m, axis=0, keepdims=True)         # (1, NQpad)
    is_min = (d2m == min_d2) & valid
    local = row - off
    # first index attaining the minimum (torch.min semantics)
    argmin = jnp.min(jnp.where(is_min, local, jnp.int32(2 ** 30)),
                     axis=0, keepdims=True)
    idx_ref[...] = jnp.where(min_d2 <= jnp.float32(ref_dist_sq), argmin,
                             jnp.int32(-1)).astype(jnp.int32)


def _reference_match(ref_points, tgt_centers, offsets, sizes, ref_distance):
    # Single invocation for the whole batch (per-image grid was pure step
    # overhead); masking via per-query [off, end) rows; lane-dense output.
    bs, nq = ref_points.shape[0], ref_points.shape[1]
    n = bs * nq
    nq_pad = _round_up(n, 128)
    m = int(tgt_centers.shape[0])
    m_pad = _round_up(max(m, 8), 8)

    ref_t = jnp.zeros((2, nq_pad), jnp.float32).at[:, :n].set(
        jnp.asarray(ref_points, jnp.float32).reshape(n, -1)[:, :2].T)
    tgt_pad = jnp.zeros((m_pad, 2), jnp.float32).at[:m, :].set(
        jnp.asarray(tgt_centers, jnp.float32))

    off64 = np.asarray(offsets, np.int64)
    sz64 = np.asarray(sizes, np.int64)
    off_q = np.zeros((1, nq_pad), np.int32)
    end_q = np.zeros((1, nq_pad), np.int32)
    off_q[0, :n] = np.repeat(off64, nq).astype(np.int32)
    end_q[0, :n] = np.repeat(off64 + sz64, nq).astype(np.int32)

    out = pl.pallas_call(
        functools.partial(_ref_match_kernel, ref_dist_sq=float(ref_distance) ** 2),
        out_shape=jax.ShapeDtypeStruct((1, nq_pad), jnp.int32),
    )(ref_t, tgt_pad, jnp.asarray(off_q), jnp.asarray(end_q))
    return out[0, :n].reshape(bs, nq)


def _box_features(boxes, w_bbox):
    # (K, 4) cxcywh -> (K, 8): [w_bbox*cx, w_bbox*cy, w_bbox*w, w_bbox*h, x0, y0, x1, y1]
    cx, cy, w, h = boxes[:, 0:1], boxes[:, 1:2], boxes[:, 2:3], boxes[:, 3:4]
    return jnp.concatenate(
        [w_bbox * cx, w_bbox * cy, w_bbox * w, w_bbox * h,
         cx - 0.5 * w, cy - 0.5 * h, cx + 0.5 * w, cy + 0.5 * h], axis=1)


# ----------------------------------------------------------------------------
# Host-side Hungarian assignment (tiny sizes -> exact brute force)
# ----------------------------------------------------------------------------
# TODO(synk): scipy.optimize.linear_sum_assignment (Hungarian algorithm) is an
# inherently sequential host-side algorithm with no clean Pallas equivalent;
# exact brute force is used here for the small synthetic sizes.
def _linear_sum_assignment_bruteforce(cost):
    n_rows, n_cols = cost.shape
    assert n_cols <= n_rows, "expects num_queries >= num_targets (DETR setup)"
    best_rows, best_cost = None, np.inf
    cols = np.arange(n_cols)
    for perm in itertools.permutations(range(n_rows), n_cols):
        c = cost[list(perm), cols].sum()
        if c < best_cost:
            best_cost, best_rows = c, np.asarray(perm)
    order = np.argsort(best_rows)
    return best_rows[order].astype(np.int64), cols[order].astype(np.int64)


# ----------------------------------------------------------------------------
# IsTPMatcher
# ----------------------------------------------------------------------------
class IsTPMatcher:
    def __init__(self, cost_class=1.0, cost_bbox=1.0, cost_giou=1.0,
                 alpha=0.25, gamma=2.0, distance_function='center',
                 ref_distance=0.1, store_cost_class=True):
        assert cost_class != 0 or cost_bbox != 0 or cost_giou != 0
        self.cost_class = float(cost_class)
        self.cost_bbox = float(cost_bbox)
        self.cost_giou = float(cost_giou)
        self.alpha = float(alpha)
        self.gamma = float(gamma)
        self.distance_function = distance_function
        self.ref_distance = float(ref_distance)
        # store_cost_class=False is the training hot-path setting: drops the
        # second output entirely and folds w_class into constants.
        self.store_cost_class = bool(store_cost_class)
        self.matcher_type = 'istp'
        self.is_tp = None
        self.cost_matrix_class = None
        self._last_C = None
        self._last_matched = None

    def return_cost_class(self):
        return self.cost_matrix_class

    def forward(self, outputs, targets, reference_points):
        bs, nq, num_classes = outputs['pred_logits'].shape
        n = bs * nq
        logits_flat = jnp.asarray(outputs['pred_logits'],
                                  jnp.float32).reshape(n, num_classes)
        boxes_flat = jnp.asarray(outputs['pred_boxes'], jnp.float32).reshape(n, 4)

        tgt_ids = jnp.concatenate([jnp.asarray(t['labels']) for t in targets])
        tgt_boxes = jnp.concatenate(
            [jnp.asarray(t['boxes'], jnp.float32) for t in targets], axis=0)
        sizes = [int(t['boxes'].shape[0]) for t in targets]
        m_total = int(sum(sizes))
        offsets = np.concatenate([[0], np.cumsum(sizes)[:-1]]).astype(np.int64)

        if m_total == 0:
            empty = (np.zeros((0,), np.int64), np.zeros((0,), np.int64))
            self.hungarian_results = [empty] * bs
            self.duplicate_match = [empty] * bs
            self.cost_matrix_class = np.zeros((bs, nq, 0), np.float32)
            return [empty] * bs

        # ---- padding + footprint-driven tile selection -----------------
        m_pad = _round_up(m_total, 128)                 # lane-dense target axis
        extra_out = m_pad * 2 if self.store_cost_class else 0
        tile, n_pad = _choose_query_tile(n, m_pad, num_classes, extra_out)

        pred_feat = _box_features(boxes_flat, self.cost_bbox)
        logits_p = jnp.zeros((n_pad, num_classes), jnp.float32).at[:n].set(logits_flat)
        feat_p = jnp.zeros((n_pad, 8), jnp.float32).at[:n].set(pred_feat)
        tgt_feat_t = jnp.zeros((8, m_pad), jnp.float32).at[:, :m_total].set(
            _box_features(tgt_boxes, self.cost_bbox).T)
        onehot_t = jnp.zeros((num_classes, m_pad), jnp.float32).at[:, :m_total].set(
            jax.nn.one_hot(tgt_ids, num_classes, dtype=jnp.float32).T)

        # ---- Kernel 1: HungarianMatcher cost matrix (tiled, parallel) ---
        kw = dict(alpha=self.alpha, gamma=self.gamma, w_class=self.cost_class,
                  w_giou=self.cost_giou, with_cls=self.store_cost_class, tile=tile)
        try:
            C_pad, cls_pad = _compute_cost_matrices(
                logits_p, feat_p, onehot_t, tgt_feat_t,
                single_buffer_invariants=True, **kw)
        except Exception:
            # Fallback for jax versions that reject pipeline_mode=pl.Buffered(1).
            C_pad, cls_pad = _compute_cost_matrices(
                logits_p, feat_p, onehot_t, tgt_feat_t,
                single_buffer_invariants=False, **kw)
        C_jax = C_pad[:n, :m_total]
        self._last_C = C_jax

        # ---- Kernel 2: distance_match 'reference' (single dispatch) -----
        # Dispatched BEFORE any blocking D2H so it overlaps the host Hungarian.
        ref_pts = jnp.asarray(reference_points, jnp.float32).reshape(bs, nq, -1)
        matched_jax = _reference_match(ref_pts, tgt_boxes[:, :2], offsets, sizes,
                                       self.ref_distance)
        self._last_matched = matched_jax

        # ---- blocking D2H of C, then host Hungarian ----------------------
        C_np = np.asarray(C_jax).reshape(bs, nq, m_total)
        hungarian_results = []
        for i in range(bs):
            if sizes[i] == 0:
                hungarian_results.append((np.zeros((0,), np.int64),
                                          np.zeros((0,), np.int64)))
            else:
                sub = C_np[i][:, offsets[i]:offsets[i] + sizes[i]]
                hungarian_results.append(_linear_sum_assignment_bruteforce(sub))
        self.hungarian_results = hungarian_results

        matched = np.asarray(matched_jax)
        if self.store_cost_class:
            self.cost_matrix_class = np.asarray(
                cls_pad[:n, :m_total].astype(jnp.float32)).reshape(bs, nq, m_total)
        else:
            self.cost_matrix_class = None

        # ---- host glue: ordered dict merge (mirrors the PyTorch loop) ----
        new_match, duplicate_match = [], []
        for i in range(bs):
            if sizes[i] > 0:
                match_idx_dict, dup_match_idx_dict = {}, {}
                hp, hg = hungarian_results[i]
                for j in range(len(hp)):
                    match_idx_dict[int(hp[j])] = int(hg[j])
                dmr = matched[i]
                for j in range(nq):
                    if dmr[j] != -1 and j not in match_idx_dict:
                        match_idx_dict[j] = int(dmr[j])
                    else:
                        dup_match_idx_dict[j] = int(dmr[j])
                new_match.append(
                    (np.asarray(list(match_idx_dict.keys()), np.int64),
                     np.asarray(list(match_idx_dict.values()), np.int64)))
                duplicate_match.append(
                    (np.asarray(list(dup_match_idx_dict.keys()), np.int64),
                     np.asarray(list(dup_match_idx_dict.values()), np.int64)))
            else:
                new_match.append((np.zeros((0,), np.int64),
                                  np.zeros((0,), np.int64)))
                duplicate_match.append((np.zeros((0,), np.int64),
                                        np.zeros((0,), np.int64)))
        self.duplicate_match = duplicate_match
        return new_match


# ----------------------------------------------------------------------------
# Plain-JAX reference for the cost matrix (numerical check of kernel 1)
# ----------------------------------------------------------------------------
def _reference_cost_matrix(logits, boxes, tgt_ids, tgt_boxes, m):
    p = jax.nn.sigmoid(logits)
    pos = m.alpha * (1 - p) ** m.gamma * (-jnp.log(p + 1e-8))
    neg = (1 - m.alpha) * p ** m.gamma * (-jnp.log(1 - p + 1e-8))
    cost_class = (pos - neg)[:, tgt_ids]
    cost_bbox = jnp.sum(jnp.abs(boxes[:, None, :] - tgt_boxes[None, :, :]), -1)

    def to_xyxy(b):
        cx, cy, w, h = b[:, 0], b[:, 1], b[:, 2], b[:, 3]
        return jnp.stack([cx - w / 2, cy - h / 2, cx + w / 2, cy + h / 2], -1)

    a, t = to_xyxy(boxes), to_xyxy(tgt_boxes)
    area1 = (a[:, 2] - a[:, 0]) * (a[:, 3] - a[:, 1])
    area2 = (t[:, 2] - t[:, 0]) * (t[:, 3] - t[:, 1])
    lt = jnp.maximum(a[:, None, :2], t[None, :, :2])
    rb = jnp.minimum(a[:, None, 2:], t[None, :, 2:])
    wh = jnp.clip(rb - lt, 0)
    inter = wh[..., 0] * wh[..., 1]
    union = area1[:, None] + area2[None, :] - inter
    iou = inter / union
    LT = jnp.minimum(a[:, None, :2], t[None, :, :2])
    RB = jnp.maximum(a[:, None, 2:], t[None, :, 2:])
    WH = jnp.clip(RB - LT, 0)
    area_c = WH[..., 0] * WH[..., 1]
    giou = iou - (area_c - union) / area_c
    return m.cost_bbox * cost_bbox + m.cost_class * cost_class + m.cost_giou * (-giou)


# ----------------------------------------------------------------------------
if __name__ == "__main__":
    key = jax.random.PRNGKey(0)
    bs, nq, num_classes = 2, 8, 8
    sizes = [2, 4]   # num gt boxes per image

    k_log, k_pbox, k_ref, k_tgt = jax.random.split(key, 4)

    def rand_boxes(k, n):
        kc, ks = jax.random.split(k)
        centers = jax.random.uniform(kc, (n, 2), minval=0.2, maxval=0.8)
        wh = jax.random.uniform(ks, (n, 2), minval=0.05, maxval=0.3)
        return jnp.concatenate([centers, wh], axis=-1).astype(jnp.float32)

    pred_logits = jax.random.normal(k_log, (bs, nq, num_classes), jnp.float32)
    pred_boxes = rand_boxes(k_pbox, bs * nq).reshape(bs, nq, 4)
    reference_points = jax.random.uniform(
        k_ref, (bs, nq, 2), minval=0.1, maxval=0.9).astype(jnp.float32)

    targets = []
    for i, tk in enumerate(jax.random.split(k_tgt, bs)):
        kb, kl = jax.random.split(tk)
        targets.append({
            'boxes': rand_boxes(kb, sizes[i]),
            'labels': jax.random.randint(kl, (sizes[i],), 0, num_classes,
                                         dtype=jnp.int32),
            'orig_size': (480, 640),   # unused for 'reference' distance
        })

    matcher = IsTPMatcher(cost_class=2.0, cost_bbox=5.0, cost_giou=2.0,
                          alpha=0.25, gamma=2.0, distance_function='center',
                          ref_distance=0.3)
    outputs = {'pred_logits': pred_logits, 'pred_boxes': pred_boxes}

    new_match = matcher.forward(outputs, targets, reference_points)
    jax.block_until_ready(matcher._last_C)
    jax.block_until_ready(matcher._last_matched)

    # numerical check of the Pallas cost-matrix kernel against plain JAX
    # (tolerance accounts for the intentional approx GIoU reciprocals)
    tgt_ids = jnp.concatenate([t['labels'] for t in targets])
    tgt_boxes = jnp.concatenate([t['boxes'] for t in targets], axis=0)
    C_ref = _reference_cost_matrix(pred_logits.reshape(bs * nq, num_classes),
                                   pred_boxes.reshape(bs * nq, 4),
                                   tgt_ids, tgt_boxes, matcher)
    if not np.allclose(np.asarray(matcher._last_C), np.asarray(C_ref),
                       rtol=1e-2, atol=1e-2):
        raise AssertionError("Pallas cost matrix mismatch vs JAX reference")

    # numerical check of the reference-distance match kernel against numpy
    ref_np = np.asarray(reference_points, np.float32).reshape(bs, nq, 2)
    tgt_np = np.asarray(tgt_boxes, np.float32)
    thr = np.float32(matcher.ref_distance ** 2)
    matched_ref = np.full((bs, nq), -1, np.int64)
    off = 0
    for i in range(bs):
        centers = tgt_np[off:off + sizes[i], :2]
        d2 = ((ref_np[i][:, None, :] - centers[None, :, :]) ** 2).sum(-1)
        mi = d2.argmin(1)
        md = d2.min(1)
        matched_ref[i] = np.where(md <= thr, mi, -1)
        off += sizes[i]
    if not (np.asarray(matcher._last_matched) == matched_ref).all():
        raise AssertionError("Pallas reference-match mismatch vs numpy")

    # sanity on the match structure
    for (pi, gi), t in zip(new_match, targets):
        assert pi.shape == gi.shape
        assert (pi >= 0).all() and (pi < nq).all()
        assert (gi >= 0).all() and (gi < t['boxes'].shape[0]).all()

    print("KERNEL_OK")
</pallas_src>

<mosaic_0001>
module attributes {stable_mosaic.version = 11 : i64} {
  func.func @_hungarian_cost_kernel(%arg0: i32, %arg1: memref<16x8xf32, #tpu.memory_space<vmem>>, %arg2: memref<16x8xf32, #tpu.memory_space<vmem>>, %arg3: memref<8x128xf32, #tpu.memory_space<vmem>>, %arg4: memref<8x128xf32, #tpu.memory_space<vmem>>, %arg5: memref<16x128xf32, #tpu.memory_space<vmem>>, %arg6: memref<16x128xbf16, #tpu.memory_space<vmem>>) attributes {dimension_semantics = [#tpu.dimension_semantics<parallel>], iteration_bounds = array<i64: 1>, scalar_prefetch = 0 : i64, scratch_operands = 0 : i64, tpu.core_type = #tpu.core_type<tc>, window_params = [{transform_indices = @transform_0, window_bounds = array<i64: 16, 8>}, {transform_indices = @transform_1, window_bounds = array<i64: 16, 8>}, {pipeline_mode = #tpu.pipeline_mode<synchronous>, transform_indices = @transform_2, window_bounds = array<i64: 8, 128>}, {pipeline_mode = #tpu.pipeline_mode<synchronous>, transform_indices = @transform_3, window_bounds = array<i64: 8, 128>}, {transform_indices = @transform_4, window_bounds = array<i64: 16, 128>}, {transform_indices = @transform_5, window_bounds = array<i64: 16, 128>}]} {
    %c0 = arith.constant 0 : index
    %c0_0 = arith.constant 0 : index
    %0 = vector.load %arg1[%c0, %c0_0] : memref<16x8xf32, #tpu.memory_space<vmem>>, vector<16x8xf32>
    %1 = math.absf %0 : vector<16x8xf32>
    %cst = arith.constant 0.000000e+00 : f32
    %2 = vector.broadcast %cst : f32 to vector<16x8xf32>
    %3 = arith.subf %2, %1 : vector<16x8xf32>
    %4 = math.exp %3 : vector<16x8xf32>
    %cst_1 = arith.constant 1.000000e+00 : f32
    %5 = vector.broadcast %cst_1 : f32 to vector<16x8xf32>
    %6 = arith.addf %5, %4 : vector<16x8xf32>
    %cst_2 = arith.constant 1.000000e+00 : f32
    %7 = vector.broadcast %cst_2 : f32 to vector<16x8xf32>
    %8 = arith.divf %7, %6 : vector<16x8xf32>
    %cst_3 = arith.constant 0.000000e+00 : f32
    %9 = vector.broadcast %cst_3 : f32 to vector<16x8xf32>
    %10 = arith.cmpf oge, %0, %9 : vector<16x8xf32>
    %11 = arith.mulf %4, %8 : vector<16x8xf32>
    %12 = arith.select %10, %8, %11 : vector<16x8xi1>, vector<16x8xf32>
    %cst_4 = arith.constant 0.000000e+00 : f32
    %13 = vector.broadcast %cst_4 : f32 to vector<16x8xf32>
    %14 = arith.maximumf %0, %13 : vector<16x8xf32>
    %cst_5 = arith.constant 1.000000e+00 : f32
    %15 = vector.broadcast %cst_5 : f32 to vector<16x8xf32>
    %16 = arith.addf %15, %4 : vector<16x8xf32>
    %17 = math.log %16 : vector<16x8xf32>
    %18 = arith.addf %14, %17 : vector<16x8xf32>
    %19 = arith.subf %18, %0 : vector<16x8xf32>
    %cst_6 = arith.constant 1.000000e+00 : f32
    %20 = vector.broadcast %cst_6 : f32 to vector<16x8xf32>
    %21 = arith.subf %20, %12 : vector<16x8xf32>
    %22 = arith.mulf %21, %21 : vector<16x8xf32>
    %23 = arith.mulf %12, %12 : vector<16x8xf32>
    %cst_7 = arith.constant 2.500000e-01 : f32
    %24 = vector.broadcast %cst_7 : f32 to vector<16x8xf32>
    %25 = arith.mulf %24, %22 : vector<16x8xf32>
    %26 = arith.mulf %25, %19 : vector<16x8xf32>
    %cst_8 = arith.constant 7.500000e-01 : f32
    %27 = vector.broadcast %cst_8 : f32 to vector<16x8xf32>
    %28 = arith.mulf %27, %23 : vector<16x8xf32>
    %29 = arith.mulf %28, %18 : vector<16x8xf32>
    %30 = arith.subf %26, %29 : vector<16x8xf32>
    %c0_9 = arith.constant 0 : index
    %c0_10 = arith.constant 0 : index
    %31 = vector.load %arg3[%c0_9, %c0_10] : memref<8x128xf32, #tpu.memory_space<vmem>>, vector<8x128xf32>
    %cst_11 = arith.constant dense<0.000000e+00> : vector<16x128xf32>
    %32 = tpu.matmul %30, %31, %cst_11 {dimension_numbers = #tpu.dot_dimension_numbers<[1], [0], [0], [1], [0, 0, 1, 1], [], []>} : vector<16x8xf32>, vector<8x128xf32>, vector<16x128xf32> -> vector<16x128xf32>
    %c0_12 = arith.constant 0 : index
    %c0_13 = arith.constant 0 : index
    %33 = vector.load %arg2[%c0_12, %c0_13] : memref<16x8xf32, #tpu.memory_space<vmem>>, vector<16x8xf32>
    %c0_14 = arith.constant 0 : index
    %c0_15 = arith.constant 0 : index
    %34 = vector.load %arg4[%c0_14, %c0_15] : memref<8x128xf32, #tpu.memory_space<vmem>>, vector<8x128xf32>
    %35 = vector.extract_strided_slice %33 {offsets = [0, 0], sizes = [16, 1], strides = [1, 1]} : vector<16x8xf32> to vector<16x1xf32>
    %36 = vector.extract_strided_slice %34 {offsets = [0, 0], sizes = [1, 128], strides = [1, 1]} : vector<8x128xf32> to vector<1x128xf32>
    %37 = vector.broadcast %35 : vector<16x1xf32> to vector<16x128xf32>
    %38 = vector.broadcast %36 : vector<1x128xf32> to vector<16x128xf32>
    %39 = arith.subf %37, %38 : vector<16x128xf32>
    %40 = math.absf %39 : vector<16x128xf32>
    %41 = vector.extract_strided_slice %33 {offsets = [0, 1], sizes = [16, 1], strides = [1, 1]} : vector<16x8xf32> to vector<16x1xf32>
    %42 = vector.extract_strided_slice %34 {offsets = [1, 0], sizes = [1, 128], strides = [1, 1]} : vector<8x128xf32> to vector<1x128xf32>
    %43 = vector.broadcast %41 : vector<16x1xf32> to vector<16x128xf32>
    %44 = vector.broadcast %42 : vector<1x128xf32> to vector<16x128xf32>
    %45 = arith.subf %43, %44 : vector<16x128xf32>
    %46 = math.absf %45 : vector<16x128xf32>
    %47 = arith.addf %40, %46 : vector<16x128xf32>
    %48 = vector.extract_strided_slice %33 {offsets = [0, 2], sizes = [16, 1], strides = [1, 1]} : vector<16x8xf32> to vector<16x1xf32>
    %49 = vector.extract_strided_slice %34 {offsets = [2, 0], sizes = [1, 128], strides = [1, 1]} : vector<8x128xf32> to vector<1x128xf32>
    %50 = vector.broadcast %48 : vector<16x1xf32> to vector<16x128xf32>
    %51 = vector.broadcast %49 : vector<1x128xf32> to vector<16x128xf32>
    %52 = arith.subf %50, %51 : vector<16x128xf32>
    %53 = math.absf %52 : vector<16x128xf32>
    %54 = arith.addf %47, %53 : vector<16x128xf32>
    %55 = vector.extract_strided_slice %33 {offsets = [0, 3], sizes = [16, 1], strides = [1, 1]} : vector<16x8xf32> to vector<16x1xf32>
    %56 = vector.extract_strided_slice %34 {offsets = [3, 0], sizes = [1, 128], strides = [1, 1]} : vector<8x128xf32> to vector<1x128xf32>
    %57 = vector.broadcast %55 : vector<16x1xf32> to vector<16x128xf32>
    %58 = vector.broadcast %56 : vector<1x128xf32> to vector<16x128xf32>
    %59 = arith.subf %57, %58 : vector<16x128xf32>
    %60 = math.absf %59 : vector<16x128xf32>
    %61 = arith.addf %54, %60 : vector<16x128xf32>
    %62 = vector.extract_strided_slice %33 {offsets = [0, 4], sizes = [16, 1], strides = [1, 1]} : vector<16x8xf32> to vector<16x1xf32>
    %63 = vector.extract_strided_slice %33 {offsets = [0, 5], sizes = [16, 1], strides = [1, 1]} : vector<16x8xf32> to vector<16x1xf32>
    %64 = vector.extract_strided_slice %33 {offsets = [0, 6], sizes = [16, 1], strides = [1, 1]} : vector<16x8xf32> to vector<16x1xf32>
    %65 = vector.extract_strided_slice %33 {offsets = [0, 7], sizes = [16, 1], strides = [1, 1]} : vector<16x8xf32> to vector<16x1xf32>
    %66 = vector.extract_strided_slice %34 {offsets = [4, 0], sizes = [1, 128], strides = [1, 1]} : vector<8x128xf32> to vector<1x128xf32>
    %67 = vector.extract_strided_slice %34 {offsets = [5, 0], sizes = [1, 128], strides = [1, 1]} : vector<8x128xf32> to vector<1x128xf32>
    %68 = vector.extract_strided_slice %34 {offsets = [6, 0], sizes = [1, 128], strides = [1, 1]} : vector<8x128xf32> to vector<1x128xf32>
    %69 = vector.extract_strided_slice %34 {offsets = [7, 0], sizes = [1, 128], strides = [1, 1]} : vector<8x128xf32> to vector<1x128xf32>
    %70 = arith.subf %64, %62 : vector<16x1xf32>
    %71 = arith.subf %65, %63 : vector<16x1xf32>
    %72 = arith.mulf %70, %71 : vector<16x1xf32>
    %73 = arith.subf %68, %66 : vector<1x128xf32>
    %74 = arith.subf %69, %67 : vector<1x128xf32>
    %75 = arith.mulf %73, %74 : vector<1x128xf32>
    %76 = vector.broadcast %64 : vector<16x1xf32> to vector<16x128xf32>
    %77 = vector.broadcast %68 : vector<1x128xf32> to vector<16x128xf32>
    %78 = arith.minimumf %76, %77 : vector<16x128xf32>
    %79 = vector.broadcast %62 : vector<16x1xf32> to vector<16x128xf32>
    %80 = vector.broadcast %66 : vector<1x128xf32> to vector<16x128xf32>
    %81 = arith.maximumf %79, %80 : vector<16x128xf32>
    %82 = arith.subf %78, %81 : vector<16x128xf32>
    %cst_16 = arith.constant 0.000000e+00 : f32
    %83 = vector.broadcast %cst_16 : f32 to vector<16x128xf32>
    %84 = arith.maximumf %82, %83 : vector<16x128xf32>
    %85 = vector.broadcast %65 : vector<16x1xf32> to vector<16x128xf32>
    %86 = vector.broadcast %69 : vector<1x128xf32> to vector<16x128xf32>
    %87 = arith.minimumf %85, %86 : vector<16x128xf32>
    %88 = vector.broadcast %63 : vector<16x1xf32> to vector<16x128xf32>
    %89 = vector.broadcast %67 : vector<1x128xf32> to vector<16x128xf32>
    %90 = arith.maximumf %88, %89 : vector<16x128xf32>
    %91 = arith.subf %87, %90 : vector<16x128xf32>
    %cst_17 = arith.constant 0.000000e+00 : f32
    %92 = vector.broadcast %cst_17 : f32 to vector<16x128xf32>
    %93 = arith.maximumf %91, %92 : vector<16x128xf32>
    %94 = arith.mulf %84, %93 : vector<16x128xf32>
    %95 = vector.broadcast %72 : vector<16x1xf32> to vector<16x128xf32>
    %96 = vector.broadcast %75 : vector<1x128xf32> to vector<16x128xf32>
    %97 = arith.addf %95, %96 : vector<16x128xf32>
    %98 = arith.subf %97, %94 : vector<16x128xf32>
    %cst_18 = arith.constant 9.99999996E-13 : f32
    %99 = vector.broadcast %cst_18 : f32 to vector<16x128xf32>
    %100 = arith.maximumf %98, %99 : vector<16x128xf32>
    %101 = tpu.reciprocal %100 {approx = true} : vector<16x128xf32> -> vector<16x128xf32>
    %102 = arith.mulf %94, %101 : vector<16x128xf32>
    %103 = vector.broadcast %64 : vector<16x1xf32> to vector<16x128xf32>
    %104 = vector.broadcast %68 : vector<1x128xf32> to vector<16x128xf32>
    %105 = arith.maximumf %103, %104 : vector<16x128xf32>
    %106 = vector.broadcast %62 : vector<16x1xf32> to vector<16x128xf32>
    %107 = vector.broadcast %66 : vector<1x128xf32> to vector<16x128xf32>
    %108 = arith.minimumf %106, %107 : vector<16x128xf32>
    %109 = arith.subf %105, %108 : vector<16x128xf32>
    %110 = vector.broadcast %65 : vector<16x1xf32> to vector<16x128xf32>
    %111 = vector.broadcast %69 : vector<1x128xf32> to vector<16x128xf32>
    %112 = arith.maximumf %110, %111 : vector<16x128xf32>
    %113 = vector.broadcast %63 : vector<16x1xf32> to vector<16x128xf32>
    %114 = vector.broadcast %67 : vector<1x128xf32> to vector<16x128xf32>
    %115 = arith.minimumf %113, %114 : vector<16x128xf32>
    %116 = arith.subf %112, %115 : vector<16x128xf32>
    %117 = arith.mulf %109, %116 : vector<16x128xf32>
    %cst_19 = arith.constant 9.99999996E-13 : f32
    %118 = vector.broadcast %cst_19 : f32 to vector<16x128xf32>
    %119 = arith.maximumf %117, %118 : vector<16x128xf32>
    %120 = tpu.reciprocal %119 {approx = true} : vector<16x128xf32> -> vector<16x128xf32>
    %121 = arith.subf %117, %98 : vector<16x128xf32>
    %122 = arith.mulf %121, %120 : vector<16x128xf32>
    %123 = arith.subf %102, %122 : vector<16x128xf32>
    %cst_20 = arith.constant 2.000000e+00 : f32
    %124 = vector.broadcast %cst_20 : f32 to vector<16x128xf32>
    %125 = arith.mulf %124, %32 : vector<16x128xf32>
    %126 = arith.addf %61, %125 : vector<16x128xf32>
    %cst_21 = arith.constant 2.000000e+00 : f32
    %127 = vector.broadcast %cst_21 : f32 to vector<16x128xf32>
    %128 = arith.mulf %127, %123 : vector<16x128xf32>
    %129 = arith.subf %126, %128 : vector<16x128xf32>
    %c0_22 = arith.constant 0 : index
    %c0_23 = arith.constant 0 : index
    %130 = vector.load %arg5[%c0_22, %c0_23] : memref<16x128xf32, #tpu.memory_space<vmem>>, vector<16x128xf32>
    tpu.vector_store %arg5[%c0_22, %c0_23], %129 {strides = array<i32>} : memref<16x128xf32, #tpu.memory_space<vmem>>, vector<16x128xf32>,
    %131 = arith.truncf %32 : vector<16x128xf32> to vector<16x128xbf16>
    %c0_24 = arith.constant 0 : index
    %c0_25 = arith.constant 0 : index
    %132 = vector.load %arg6[%c0_24, %c0_25] : memref<16x128xbf16, #tpu.memory_space<vmem>>, vector<16x128xbf16>
    tpu.vector_store %arg6[%c0_24, %c0_25], %131 {strides = array<i32>} : memref<16x128xbf16, #tpu.memory_space<vmem>>, vector<16x128xbf16>,
    return
  }
  func.func @transform_0(%arg0: i32) -> (i32, i32) {
    %c0_i32 = arith.constant 0 : i32
    %c0_i32_0 = arith.constant 0 : i32
    return %arg0, %c0_i32 : i32, i32
  }
  func.func @transform_1(%arg0: i32) -> (i32, i32) {
    %c0_i32 = arith.constant 0 : i32
    %c0_i32_0 = arith.constant 0 : i32
    return %arg0, %c0_i32 : i32, i32
  }
  func.func @transform_2(%arg0: i32) -> (i32, i32) {
    %c0_i32 = arith.constant 0 : i32
    %c0_i32_0 = arith.constant 0 : i32
    %c0_i32_1 = arith.constant 0 : i32
    return %c0_i32, %c0_i32_0 : i32, i32
  }
  func.func @transform_3(%arg0: i32) -> (i32, i32) {
    %c0_i32 = arith.constant 0 : i32
    %c0_i32_0 = arith.constant 0 : i32
    %c0_i32_1 = arith.constant 0 : i32
    return %c0_i32, %c0_i32_0 : i32, i32
  }
  func.func @transform_4(%arg0: i32) -> (i32, i32) {
    %c0_i32 = arith.constant 0 : i32
    %c0_i32_0 = arith.constant 0 : i32
    return %arg0, %c0_i32 : i32, i32
  }
  func.func @transform_5(%arg0: i32) -> (i32, i32) {
    %c0_i32 = arith.constant 0 : i32
    %c0_i32_0 = arith.constant 0 : i32
    return %arg0, %c0_i32 : i32, i32
  }
}

module attributes {stable_mosaic.version = 11 : i64} {
  func.func @_hungarian_cost_kernel(%arg0: i32, %arg1: memref<16x8xf32, #tpu.memory_space<vmem>>, %arg2: memref<16x8xf32, #tpu.memory_space<vmem>>, %arg3: memref<8x128xf32, #tpu.memory_space<vmem>>, %arg4: memref<8x128xf32, #tpu.memory_space<vmem>>, %arg5: memref<16x128xf32, #tpu.memory_space<vmem>>, %arg6: memref<16x128xbf16, #tpu.memory_space<vmem>>) attributes {dimension_semantics = [#tpu.dimension_semantics<parallel>], iteration_bounds = array<i64: 1>, scalar_prefetch = 0 : i64, scratch_operands = 0 : i64, tpu.core_type = #tpu.core_type<tc>, window_params = [{transform_indices = @transform_0, window_bounds = array<i64: 16, 8>}, {transform_indices = @transform_1, window_bounds = array<i64: 16, 8>}, {pipeline_mode = #tpu.pipeline_mode<synchronous>, transform_indices = @transform_2, window_bounds = array<i64: 8, 128>}, {pipeline_mode = #tpu.pipeline_mode<synchronous>, transform_indices = @transform_3, window_bounds = array<i64: 8, 128>}, {transform_indices = @transform_4, window_bounds = array<i64: 16, 128>}, {transform_indices = @transform_5, window_bounds = array<i64: 16, 128>}]} {
    %c0 = arith.constant 0 : index
    %c0_0 = arith.constant 0 : index
    %0 = vector.load %arg1[%c0, %c0_0] : memref<16x8xf32, #tpu.memory_space<vmem>>, vector<16x8xf32>
    %1 = math.absf %0 : vector<16x8xf32>
    %cst = arith.constant 0.000000e+00 : f32
    %2 = vector.broadcast %cst : f32 to vector<16x8xf32>
    %3 = arith.subf %2, %1 : vector<16x8xf32>
    %4 = math.exp %3 : vector<16x8xf32>
    %cst_1 = arith.constant 1.000000e+00 : f32
    %5 = vector.broadcast %cst_1 : f32 to vector<16x8xf32>
    %6 = arith.addf %5, %4 : vector<16x8xf32>
    %cst_2 = arith.constant 1.000000e+00 : f32
    %7 = vector.broadcast %cst_2 : f32 to vector<16x8xf32>
    %8 = arith.divf %7, %6 : vector<16x8xf32>
    %cst_3 = arith.constant 0.000000e+00 : f32
    %9 = vector.broadcast %cst_3 : f32 to vector<16x8xf32>
    %10 = arith.cmpf oge, %0, %9 : vector<16x8xf32>
    %11 = arith.mulf %4, %8 : vector<16x8xf32>
    %12 = arith.select %10, %8, %11 : vector<16x8xi1>, vector<16x8xf32>
    %cst_4 = arith.constant 0.000000e+00 : f32
    %13 = vector.broadcast %cst_4 : f32 to vector<16x8xf32>
    %14 = arith.maximumf %0, %13 : vector<16x8xf32>
    %cst_5 = arith.constant 1.000000e+00 : f32
    %15 = vector.broadcast %cst_5 : f32 to vector<16x8xf32>
    %16 = arith.addf %15, %4 : vector<16x8xf32>
    %17 = math.log %16 : vector<16x8xf32>
    %18 = arith.addf %14, %17 : vector<16x8xf32>
    %19 = arith.subf %18, %0 : vector<16x8xf32>
    %cst_6 = arith.constant 1.000000e+00 : f32
    %20 = vector.broadcast %cst_6 : f32 to vector<16x8xf32>
    %21 = arith.subf %20, %12 : vector<16x8xf32>
    %22 = arith.mulf %21, %21 : vector<16x8xf32>
    %23 = arith.mulf %12, %12 : vector<16x8xf32>
    %cst_7 = arith.constant 2.500000e-01 : f32
    %24 = vector.broadcast %cst_7 : f32 to vector<16x8xf32>
    %25 = arith.mulf %24, %22 : vector<16x8xf32>
    %26 = arith.mulf %25, %19 : vector<16x8xf32>
    %cst_8 = arith.constant 7.500000e-01 : f32
    %27 = vector.broadcast %cst_8 : f32 to vector<16x8xf32>
    %28 = arith.mulf %27, %23 : vector<16x8xf32>
    %29 = arith.mulf %28, %18 : vector<16x8xf32>
    %30 = arith.subf %26, %29 : vector<16x8xf32>
    %c0_9 = arith.constant 0 : index
    %c0_10 = arith.constant 0 : index
    %31 = vector.load %arg3[%c0_9, %c0_10] : memref<8x128xf32, #tpu.memory_space<vmem>>, vector<8x128xf32>
    %cst_11 = arith.constant dense<0.000000e+00> : vector<16x128xf32>
    %32 = tpu.matmul %30, %31, %cst_11 {dimension_numbers = #tpu.dot_dimension_numbers<[1], [0], [0], [1], [0, 0, 1, 1], [], []>} : vector<16x8xf32>, vector<8x128xf32>, vector<16x128xf32> -> vector<16x128xf32>
    %c0_12 = arith.constant 0 : index
    %c0_13 = arith.constant 0 : index
    %33 = vector.load %arg2[%c0_12, %c0_13] : memref<16x8xf32, #tpu.memory_space<vmem>>, vector<16x8xf32>
    %c0_14 = arith.constant 0 : index
    %c0_15 = arith.constant 0 : index
    %34 = vector.load %arg4[%c0_14, %c0_15] : memref<8x128xf32, #tpu.memory_space<vmem>>, vector<8x128xf32>
    %35 = vector.extract_strided_slice %33 {offsets = [0, 0], sizes = [16, 1], strides = [1, 1]} : vector<16x8xf32> to vector<16x1xf32>
    %36 = vector.extract_strided_slice %34 {offsets = [0, 0], sizes = [1, 128], strides = [1, 1]} : vector<8x128xf32> to vector<1x128xf32>
    %37 = vector.broadcast %35 : vector<16x1xf32> to vector<16x128xf32>
    %38 = vector.broadcast %36 : vector<1x128xf32> to vector<16x128xf32>
    %39 = arith.subf %37, %38 : vector<16x128xf32>
    %40 = math.absf %39 : vector<16x128xf32>
    %41 = vector.extract_strided_slice %33 {offsets = [0, 1], sizes = [16, 1], strides = [1, 1]} : vector<16x8xf32> to vector<16x1xf32>
    %42 = vector.extract_strided_slice %34 {offsets = [1, 0], sizes = [1, 128], strides = [1, 1]} : vector<8x128xf32> to vector<1x128xf32>
    %43 = vector.broadcast %41 : vector<16x1xf32> to vector<16x128xf32>
    %44 = vector.broadcast %42 : vector<1x128xf32> to vector<16x128xf32>
    %45 = arith.subf %43, %44 : vector<16x128xf32>
    %46 = math.absf %45 : vector<16x128xf32>
    %47 = arith.addf %40, %46 : vector<16x128xf32>
    %48 = vector.extract_strided_slice %33 {offsets = [0, 2], sizes = [16, 1], strides = [1, 1]} : vector<16x8xf32> to vector<16x1xf32>
    %49 = vector.extract_strided_slice %34 {offsets = [2, 0], sizes = [1, 128], strides = [1, 1]} : vector<8x128xf32> to vector<1x128xf32>
    %50 = vector.broadcast %48 : vector<16x1xf32> to vector<16x128xf32>
    %51 = vector.broadcast %49 : vector<1x128xf32> to vector<16x128xf32>
    %52 = arith.subf %50, %51 : vector<16x128xf32>
    %53 = math.absf %52 : vector<16x128xf32>
    %54 = arith.addf %47, %53 : vector<16x128xf32>
    %55 = vector.extract_strided_slice %33 {offsets = [0, 3], sizes = [16, 1], strides = [1, 1]} : vector<16x8xf32> to vector<16x1xf32>
    %56 = vector.extract_strided_slice %34 {offsets = [3, 0], sizes = [1, 128], strides = [1, 1]} : vector<8x128xf32> to vector<1x128xf32>
    %57 = vector.broadcast %55 : vector<16x1xf32> to vector<16x128xf32>
    %58 = vector.broadcast %56 : vector<1x128xf32> to vector<16x128xf32>
    %59 = arith.subf %57, %58 : vector<16x128xf32>
    %60 = math.absf %59 : vector<16x128xf32>
    %61 = arith.addf %54, %60 : vector<16x128xf32>
    %62 = vector.extract_strided_slice %33 {offsets = [0, 4], sizes = [16, 1], strides = [1, 1]} : vector<16x8xf32> to vector<16x1xf32>
    %63 = vector.extract_strided_slice %33 {offsets = [0, 5], sizes = [16, 1], strides = [1, 1]} : vector<16x8xf32> to vector<16x1xf32>
    %64 = vector.extract_strided_slice %33 {offsets = [0, 6], sizes = [16, 1], strides = [1, 1]} : vector<16x8xf32> to vector<16x1xf32>
    %65 = vector.extract_strided_slice %33 {offsets = [0, 7], sizes = [16, 1], strides = [1, 1]} : vector<16x8xf32> to vector<16x1xf32>
    %66 = vector.extract_strided_slice %34 {offsets = [4, 0], sizes = [1, 128], strides = [1, 1]} : vector<8x128xf32> to vector<1x128xf32>
    %67 = vector.extract_strided_slice %34 {offsets = [5, 0], sizes = [1, 128], strides = [1, 1]} : vector<8x128xf32> to vector<1x128xf32>
    %68 = vector.extract_strided_slice %34 {offsets = [6, 0], sizes = [1, 128], strides = [1, 1]} : vector<8x128xf32> to vector<1x128xf32>
    %69 = vector.extract_strided_slice %34 {offsets = [7, 0], sizes = [1, 128], strides = [1, 1]} : vector<8x128xf32> to vector<1x128xf32>
    %70 = arith.subf %64, %62 : vector<16x1xf32>
    %71 = arith.subf %65, %63 : vector<16x1xf32>
    %72 = arith.mulf %70, %71 : vector<16x1xf32>
    %73 = arith.subf %68, %66 : vector<1x128xf32>
    %74 = arith.subf %69, %67 : vector<1x128xf32>
    %75 = arith.mulf %73, %74 : vector<1x128xf32>
    %76 = vector.broadcast %64 : vector<16x1xf32> to vector<16x128xf32>
    %77 = vector.broadcast %68 : vector<1x128xf32> to vector<16x128xf32>
    %78 = arith.minimumf %76, %77 : vector<16x128xf32>
    %79 = vector.broadcast %62 : vector<16x1xf32> to vector<16x128xf32>
    %80 = vector.broadcast %66 : vector<1x128xf32> to vector<16x128xf32>
    %81 = arith.maximumf %79, %80 : vector<16x128xf32>
    %82 = arith.subf %78, %81 : vector<16x128xf32>
    %cst_16 = arith.constant 0.000000e+00 : f32
    %83 = vector.broadcast %cst_16 : f32 to vector<16x128xf32>
    %84 = arith.maximumf %82, %83 : vector<16x128xf32>
    %85 = vector.broadcast %65 : vector<16x1xf32> to vector<16x128xf32>
    %86 = vector.broadcast %69 : vector<1x128xf32> to vector<16x128xf32>
    %87 = arith.minimumf %85, %86 : vector<16x128xf32>
    %88 = vector.broadcast %63 : vector<16x1xf32> to vector<16x128xf32>
    %89 = vector.broadcast %67 : vector<1x128xf32> to vector<16x128xf32>
    %90 = arith.maximumf %88, %89 : vector<16x128xf32>
    %91 = arith.subf %87, %90 : vector<16x128xf32>
    %cst_17 = arith.constant 0.000000e+00 : f32
    %92 = vector.broadcast %cst_17 : f32 to vector<16x128xf32>
    %93 = arith.maximumf %91, %92 : vector<16x128xf32>
    %94 = arith.mulf %84, %93 : vector<16x128xf32>
    %95 = vector.broadcast %72 : vector<16x1xf32> to vector<16x128xf32>
    %96 = vector.broadcast %75 : vector<1x128xf32> to vector<16x128xf32>
    %97 = arith.addf %95, %96 : vector<16x128xf32>
    %98 = arith.subf %97, %94 : vector<16x128xf32>
    %cst_18 = arith.constant 9.99999996E-13 : f32
    %99 = vector.broadcast %cst_18 : f32 to vector<16x128xf32>
    %100 = arith.maximumf %98, %99 : vector<16x128xf32>
    %101 = tpu.reciprocal %100 {approx = true} : vector<16x128xf32> -> vector<16x128xf32>
    %102 = arith.mulf %94, %101 : vector<16x128xf32>
    %103 = vector.broadcast %64 : vector<16x1xf32> to vector<16x128xf32>
    %104 = vector.broadcast %68 : vector<1x128xf32> to vector<16x128xf32>
    %105 = arith.maximumf %103, %104 : vector<16x128xf32>
    %106 = vector.broadcast %62 : vector<16x1xf32> to vector<16x128xf32>
    %107 = vector.broadcast %66 : vector<1x128xf32> to vector<16x128xf32>
    %108 = arith.minimumf %106, %107 : vector<16x128xf32>
    %109 = arith.subf %105, %108 : vector<16x128xf32>
    %110 = vector.broadcast %65 : vector<16x1xf32> to vector<16x128xf32>
    %111 = vector.broadcast %69 : vector<1x128xf32> to vector<16x128xf32>
    %112 = arith.maximumf %110, %111 : vector<16x128xf32>
    %113 = vector.broadcast %63 : vector<16x1xf32> to vector<16x128xf32>
    %114 = vector.broadcast %67 : vector<1x128xf32> to vector<16x128xf32>
    %115 = arith.minimumf %113, %114 : vector<16x128xf32>
    %116 = arith.subf %112, %115 : vector<16x128xf32>
    %117 = arith.mulf %109, %116 : vector<16x128xf32>
    %cst_19 = arith.constant 9.99999996E-13 : f32
    %118 = vector.broadcast %cst_19 : f32 to vector<16x128xf32>
    %119 = arith.maximumf %117, %118 : vector<16x128xf32>
    %120 = tpu.reciprocal %119 {approx = true} : vector<16x128xf32> -> vector<16x128xf32>
    %121 = arith.subf %117, %98 : vector<16x128xf32>
    %122 = arith.mulf %121, %120 : vector<16x128xf32>
    %123 = arith.subf %102, %122 : vector<16x128xf32>
    %cst_20 = arith.constant 2.000000e+00 : f32
    %124 = vector.broadcast %cst_20 : f32 to vector<16x128xf32>
    %125 = arith.mulf %124, %32 : vector<16x128xf32>
    %126 = arith.addf %61, %125 : vector<16x128xf32>
    %cst_21 = arith.constant 2.000000e+00 : f32
    %127 = vector.broadcast %cst_21 : f32 to vector<16x128xf32>
    %128 = arith.mulf %127, %123 : vector<16x128xf32>
    %129 = arith.subf %126, %128 : vector<16x128xf32>
    %c0_22 = arith.constant 0 : index
    %c0_23 = arith.constant 0 : index
    %130 = vector.load %arg5[%c0_22, %c0_23] : memref<16x128xf32, #tpu.memory_space<vmem>>, vector<16x128xf32>
    tpu.vector_store %arg5[%c0_22, %c0_23], %129 {strides = array<i32>} : memref<16x128xf32, #tpu.memory_space<vmem>>, vector<16x128xf32>,
    %131 = arith.truncf %32 : vector<16x128xf32> to vector<16x128xbf16>
    %c0_24 = arith.constant 0 : index
    %c0_25 = arith.constant 0 : index
    %132 = vector.load %arg6[%c0_24, %c0_25] : memref<16x128xbf16, #tpu.memory_space<vmem>>, vector<16x128xbf16>
    tpu.vector_store %arg6[%c0_24, %c0_25], %131 {strides = array<i32>} : memref<16x128xbf16, #tpu.memory_space<vmem>>, vector<16x128xbf16>,
    return
  }
  func.func @transform_0(%arg0: i32) -> (i32, i32) {
    %c0_i32 = arith.constant 0 : i32
    %c0_i32_0 = arith.constant 0 : i32
    return %arg0, %c0_i32 : i32, i32
  }
  func.func @transform_1(%arg0: i32) -> (i32, i32) {
    %c0_i32 = arith.constant 0 : i32
    %c0_i32_0 = arith.constant 0 : i32
    return %arg0, %c0_i32 : i32, i32
  }
  func.func @transform_2(%arg0: i32) -> (i32, i32) {
    %c0_i32 = arith.constant 0 : i32
    %c0_i32_0 = arith.constant 0 : i32
    %c0_i32_1 = arith.constant 0 : i32
    return %c0_i32, %c0_i32_0 : i32, i32
  }
  func.func @transform_3(%arg0: i32) -> (i32, i32) {
    %c0_i32 = arith.constant 0 : i32
    %c0_i32_0 = arith.constant 0 : i32
    %c0_i32_1 = arith.constant 0 : i32
    return %c0_i32, %c0_i32_0 : i32, i32
  }
  func.func @transform_4(%arg0: i32) -> (i32, i32) {
    %c0_i32 = arith.constant 0 : i32
    %c0_i32_0 = arith.constant 0 : i32
    return %arg0, %c0_i32 : i32, i32
  }
  func.func @transform_5(%arg0: i32) -> (i32, i32) {
    %c0_i32 = arith.constant 0 : i32
    %c0_i32_0 = arith.constant 0 : i32
    return %arg0, %c0_i32 : i32, i32
  }
}

</mosaic_0001>

<llo_original>
// kernel: tpu_custom_call.1
$region0: #{tpu_custom_call.1}
  #allocation0 [shape = 'u32[]', space=smem, size = 0x4, offset = 0x4, fixed_abs, tag = 'smem constant byte address 0x4 - core index']
  #allocation1 [shape = 'u32[144,128]{1,0:T(1,128)}', space=vmem, size = 0x12000, scoped, tag = 'internal scratch']
  %s0 = inlined_call_operand.vmem [shape: f32[16,8], index: 0, kind: input, shape index: {}]
  %s1 = inlined_call_operand.vmem [shape: f32[16,8], index: 1, kind: input, shape index: {}]
  %s2 = inlined_call_operand.vmem [shape: f32[8,128], index: 2, kind: input, shape index: {}]
  %s3 = inlined_call_operand.vmem [shape: f32[8,128], index: 3, kind: input, shape index: {}]
  %s4 = inlined_call_operand.hbm [shape: f32[16,128], index: 4, kind: output, shape index: {0}]
  %s5 = inlined_call_operand.hbm [shape: bf16[16,128], index: 5, kind: output, shape index: {1}]
  %6 = xla_tuple %s4, %s5
  %s7 = sld [smem:[#allocation0]]
  $region34: #{tpu_custom_call.1} parent=0
    _
  %s9 = ssub.s32 1, %s7
  %s10 = scalar_select 0, %s9, %s7
  $region1: #{tpu_custom_call.1} parent=0
    #allocation2 [shape = 'u8[8192]{0}', space=vmem, size = 0x2000, scoped, tag = 'output window, operand 0, single buffered']
    #allocation3 [shape = 's32[1]{0}', space=sflag, size = 0x4, scoped, tag = 'scoped memory for tpu_custom_call.1']
    #allocation4 [shape = 'u8[4096]{0}', space=vmem, size = 0x1000, scoped, tag = 'output window, operand 1, single buffered']
    #allocation5 [shape = 's32[1]{0}', space=sflag, size = 0x4, scoped, tag = 'scoped memory for tpu_custom_call.1']
    %11 = vsyncpa [#allocation3], 0
    %12 = vsyncpa [#allocation5], 0
    // Predicated region
    $region2: #{tpu_custom_call.1} parent=1 // pred_check
      _
    $region3: #{tpu_custom_call.1} parent=1 // pred_check_branch
      %14 = sbr.rel (0) target = $region5
    $region4: #{tpu_custom_call.1} parent=1 // pred_region
      _
    $region5: #{tpu_custom_call.1} parent=1 // pred_fallthru
      _
    // Predicated region
    $region6: #{tpu_custom_call.1} parent=1 // pred_check
      _
    $region7: #{tpu_custom_call.1} parent=1 // pred_check_branch
      %16 = sbr.rel (0) target = $region9
    $region8: #{tpu_custom_call.1} parent=1 // pred_region
      _
    $region9: #{tpu_custom_call.1} parent=1 // pred_fallthru
      _
    // Predicated region
    $region10: #{tpu_custom_call.1} parent=1 // pred_check
      _
    $region11: #{tpu_custom_call.1} parent=1 // pred_check_branch
      %18 = sbr.rel (0) target = $region13
    $region12: #{tpu_custom_call.1} parent=1 // pred_region
      _
    $region13: #{tpu_custom_call.1} parent=1 // pred_fallthru
      _
    // Predicated region
    $region14: #{tpu_custom_call.1} parent=1 // pred_check
      _
    $region15: #{tpu_custom_call.1} parent=1 // pred_check_branch
      %20 = sbr.rel (0) target = $region17
    $region16: #{tpu_custom_call.1} parent=1 // pred_region
      _
    $region17: #{tpu_custom_call.1} parent=1 // pred_fallthru
      _
    %v21 = vld [vmem:[%s0] sm:$0xff]
    %v22 = vld [vmem:[%s0 + $0x8] sm:$0xff]
    %v23 = vand.u32 2147483647, %v21
    %v24 = vand.u32 2147483647, %v22
    %v25 = vsub.f32 0.0, %v23
    %v26 = vsub.f32 0.0, %v24
    %v27 = vmul.f32 %v25, 1.442695
    %v28 = vpow.pop %v27
    %v29 = vmul.f32 %v26, 1.442695
    %v30 = vpow.pop %v29
    %v31 = vadd.f32 %v28, 1.0
    %v32 = vadd.f32 %v30, 1.0
    %v33 = vrcp.pop %v31
    %v34 = vmul.f32 1.0, %v33
    %v35 = vrcp.pop %v32
    %v36 = vmul.f32 1.0, %v35
    %vm37 = vcmp.ge.f32.partialorder %v21, 0.0
    %vm38 = vcmp.ge.f32.partialorder %v22, 0.0
    %v39 = vmul.f32 %v28, %v34
    %v40 = vmul.f32 %v30, %v36
    %v41 = vsel %vm37, %v34, %v39
    %v42 = vsel %vm38, %v36, %v40
    %v43 = vmax.f32 %v21, 0.0
    %v44 = vmax.f32 %v22, 0.0
    %v45 = vlog2.pop %v31
    %v46 = vmul.f32 %v45, 0.6931472
    %v47 = vlog2.pop %v32
    %v48 = vmul.f32 %v47, 0.6931472
    %v49 = vadd.f32 %v43, %v46
    %v50 = vadd.f32 %v44, %v48
    %v51 = vsub.f32 %v49, %v21
    %v52 = vsub.f32 %v50, %v22
    %v53 = vsub.f32 1.0, %v41
    %v54 = vsub.f32 1.0, %v42
    %v55 = vmul.f32 %v53, %v53
    %v56 = vmul.f32 %v54, %v54
    %v57 = vmul.f32 %v41, %v41
    %v58 = vmul.f32 %v42, %v42
    %v59 = vmul.f32 %v55, 0.25
    %v60 = vmul.f32 %v56, 0.25
    %v61 = vmul.f32 %v59, %v51
    %v62 = vmul.f32 %v60, %v52
    %v63 = vmul.f32 %v57, 0.75
    %v64 = vmul.f32 %v58, 0.75
    %v65 = vmul.f32 %v63, %v49
    %v66 = vmul.f32 %v64, %v50
    %v67 = vsub.f32 %v61, %v65
    %v68 = vsub.f32 %v62, %v66
    %v69 = vld [vmem:[%s2] sm:$0xff]
    %vm70 = vcmask 64512
    %v72 = vsel %vm70, %v67, 0
    %v75 = vsel %vm70, %v68, 0
    %77 = vmatprep.subr.mxu0 0.0
    %78 = vmatpush1.msra.mxu0 %v69
    %79 = vmatprep.subr.mxu0 0.0
    %80 = vmatpush1.msra.mxu0 0.0
    %81 = vmatprep.subr.mxu0 0.0
    %82 = vmatpush1.msra.mxu0 0.0
    %83 = vmatprep.subr.mxu0 0.0
    %84 = vmatpush1.msra.mxu0 0.0
    %85 = vmatprep.subr.mxu0 0.0
    %86 = vmatpush1.msra.mxu0 0.0
    %87 = vmatprep.subr.mxu0 0.0
    %88 = vmatpush1.msra.mxu0 0.0
    %89 = vmatprep.subr.mxu0 0.0
    %90 = vmatpush1.msra.mxu0 0.0
    %91 = vmatprep.subr.mxu0 0.0
    %92 = vmatpush1.msra.mxu0 0.0
    %93 = vmatprep.subr.mxu0 0.0
    %94 = vmatpush1.msra.mxu0 0.0
    %95 = vmatprep.subr.mxu0 0.0
    %96 = vmatpush1.msra.mxu0 0.0
    %97 = vmatprep.subr.mxu0 0.0
    %98 = vmatpush1.msra.mxu0 0.0
    %99 = vmatprep.subr.mxu0 0.0
    %100 = vmatpush1.msra.mxu0 0.0
    %101 = vmatprep.subr.mxu0 0.0
    %102 = vmatpush1.msra.mxu0 0.0
    %103 = vmatprep.subr.mxu0 0.0
    %104 = vmatpush1.msra.mxu0 0.0
    %105 = vmatprep.subr.mxu0 0.0
    %106 = vmatpush1.msra.mxu0 0.0
    %107 = vmatprep.subr.mxu0 0.0
    %108 = vmatpush1.msra.mxu0 0.0
    %109 = vmatprep.subr.mxu0 0.0
    %110 = vmatpush1.msra.mxu0 0.0
    %111 = vmatprep.subr.mxu0 0.0
    %112 = vmatpush1.msra.mxu0 0.0
    %113 = vmatprep.subr.mxu0 0.0
    %114 = vmatpush1.msra.mxu0 0.0
    %115 = vmatprep.subr.mxu0 0.0
    %116 = vmatpush1.msra.mxu0 0.0
    %117 = vmatprep.subr.mxu0 0.0
    %118 = vmatpush1.msra.mxu0 0.0
    %119 = vmatprep.subr.mxu0 0.0
    %120 = vmatpush1.msra.mxu0 0.0
    %121 = vmatprep.subr.mxu0 0.0
    %122 = vmatpush1.msra.mxu0 0.0
    %123 = vmatprep.subr.mxu0 0.0
    %124 = vmatpush1.msra.mxu0 0.0
    %125 = vmatprep.subr.mxu0 0.0
    %126 = vmatpush1.msra.mxu0 0.0
    %127 = vmatprep.subr.mxu0 0.0
    %128 = vmatpush1.msra.mxu0 0.0
    %129 = vmatprep.subr.mxu0 0.0
    %130 = vmatpush1.msra.mxu0 0.0
    %131 = vmatprep.subr.mxu0 0.0
    %132 = vmatpush1.msra.mxu0 0.0
    %133 = vmatprep.subr.mxu0 0.0
    %134 = vmatpush1.msra.mxu0 0.0
    %135 = vmatprep.subr.mxu0 0.0
    %136 = vmatpush1.msra.mxu0 0.0
    %137 = vmatprep.subr.mxu0 0.0
    %138 = vmatpush1.msra.mxu0 0.0
    %139 = vmatprep.subr.mxu0 0.0
    %140 = vmatpush1.msra.mxu0 0.0
    %141 = vmatprep.mubr.f32.mxu0 0.0
    %142 = vmatmul.mubr.f32.gmra.mrb[0].mxu0 %v72
    %v143 = vpop.f32.mrb[0].mxu0
    %v144 = vadd.f32 0.0, %v143
    %v145 = vpop.f32.mrb[0].mxu0
    %146 = vmatprep.mubr.f32.mxu0 0.0
    %147 = vmatmul.mubr.f32.gmra.mrb[0].mxu0 %v75
    %v148 = vpop.f32.mrb[0].mxu0
    %v149 = vadd.f32 0.0, %v148
    %v150 = vpop.f32.mrb[0].mxu0
    %151 = vdwg.mxu0
    %v152 = vld [vmem:[%s1] sm:$0xff]
    %v153 = vld [vmem:[%s1 + $0x8] sm:$0xff]
    %v154 = vld [vmem:[%s3] sm:$0xff]
    %156 = vset.pattern.permute.xlu0 0
    %157 = vperm.xlu0 %156, %v152
    %v158 = vpop.permute.xlu0 %157
    %161 = vset.pattern.permute.xlu0 0
    %162 = vperm.xlu0 %161, %v153
    %v163 = vpop.permute.xlu0 %162
    %v165 = vlaneseq
    %v166 = vshrl.u32 %v165, 7
    %v167 = vsub.s32 0, %v166
    %v168 = vrot.slane %v154, %v167
    %v169 = vsub.f32 %v158, %v168
    %v170 = vsub.f32 %v163, %v168
    %v171 = vand.u32 2147483647, %v169
    %v172 = vand.u32 2147483647, %v170
    %173 = vset.pattern.permute.xlu0 1
    %174 = vperm.xlu0 %173, %v152
    %v175 = vpop.permute.xlu0 %174
    %177 = vset.pattern.permute.xlu0 1
    %178 = vperm.xlu0 %177, %v153
    %v179 = vpop.permute.xlu0 %178
    %v181 = vlaneseq
    %v182 = vshrl.u32 %v181, 7
    %v183 = vsub.s32 1, %v182
    %v184 = vrot.slane %v154, %v183
    %v185 = vsub.f32 %v175, %v184
    %v186 = vsub.f32 %v179, %v184
    %v187 = vand.u32 2147483647, %v185
    %v188 = vand.u32 2147483647, %v186
    %v189 = vadd.f32 %v171, %v187
    %v190 = vadd.f32 %v172, %v188
    %191 = vset.pattern.permute.xlu0 2
    %192 = vperm.xlu0 %191, %v152
    %v193 = vpop.permute.xlu0 %192
    %195 = vset.pattern.permute.xlu0 2
    %196 = vperm.xlu0 %195, %v153
    %v197 = vpop.permute.xlu0 %196
    %v199 = vlaneseq
    %v200 = vshrl.u32 %v199, 7
    %v201 = vsub.s32 2, %v200
    %v202 = vrot.slane %v154, %v201
    %v203 = vsub.f32 %v193, %v202
    %v204 = vsub.f32 %v197, %v202
    %v205 = vand.u32 2147483647, %v203
    %v206 = vand.u32 2147483647, %v204
    %v207 = vadd.f32 %v189, %v205
    %v208 = vadd.f32 %v190, %v206
    %209 = vset.pattern.permute.xlu0 3
    %210 = vperm.xlu0 %209, %v152
    %v211 = vpop.permute.xlu0 %210
    %213 = vset.pattern.permute.xlu0 3
    %214 = vperm.xlu0 %213, %v153
    %v215 = vpop.permute.xlu0 %214
    %v217 = vlaneseq
    %v218 = vshrl.u32 %v217, 7
    %v219 = vsub.s32 3, %v218
    %v220 = vrot.slane %v154, %v219
    %v221 = vsub.f32 %v211, %v220
    %v222 = vsub.f32 %v215, %v220
    %v223 = vand.u32 2147483647, %v221
    %v224 = vand.u32 2147483647, %v222
    %v225 = vadd.f32 %v207, %v223
    %v226 = vadd.f32 %v208, %v224
    %227 = vrot.lane.b32.xlu0 %v152, 2
    %v228 = vpop.permute.xlu0 %227
    %229 = vrot.lane.b32.xlu0 %v153, 2
    %v230 = vpop.permute.xlu0 %229
    %v233 = vsub.f32 %v152, %v228
    %v234 = vsub.f32 %v153, %v230
    %237 = vrot.lane.b32.xlu0 %v233, 127
    %v238 = vpop.permute.xlu0 %237
    %239 = vrot.lane.b32.xlu0 %v234, 127
    %v240 = vpop.permute.xlu0 %239
    %v243 = vmul.f32 %v233, %v238
    %v244 = vmul.f32 %v234, %v240
    %v246 = vrot.slane %v154, 6
    %v248 = vsub.f32 %v154, %v246
    %v250 = vrot.slane %v248, 1
    %v252 = vmul.f32 %v248, %v250
    %253 = vset.pattern.permute.xlu0 6
    %254 = vperm.xlu0 %253, %v152
    %v255 = vpop.permute.xlu0 %254
    %257 = vset.pattern.permute.xlu0 6
    %258 = vperm.xlu0 %257, %v153
    %v259 = vpop.permute.xlu0 %258
    %v261 = vlaneseq
    %v262 = vshrl.u32 %v261, 7
    %v263 = vsub.s32 6, %v262
    %v264 = vrot.slane %v154, %v263
    %v265 = vmin.f32 %v255, %v264
    %v266 = vmin.f32 %v259, %v264
    %267 = vset.pattern.permute.xlu0 4
    %268 = vperm.xlu0 %267, %v152
    %v269 = vpop.permute.xlu0 %268
    %271 = vset.pattern.permute.xlu0 4
    %272 = vperm.xlu0 %271, %v153
    %v273 = vpop.permute.xlu0 %272
    %v275 = vlaneseq
    %v276 = vshrl.u32 %v275, 7
    %v277 = vsub.s32 4, %v276
    %v278 = vrot.slane %v154, %v277
    %v279 = vmax.f32 %v269, %v278
    %v280 = vmax.f32 %v273, %v278
    %v281 = vsub.f32 %v265, %v279
    %v282 = vsub.f32 %v266, %v280
    %v283 = vmax.f32 %v281, 0.0
    %v284 = vmax.f32 %v282, 0.0
    %285 = vset.pattern.permute.xlu0 7
    %286 = vperm.xlu0 %285, %v152
    %v287 = vpop.permute.xlu0 %286
    %289 = vset.pattern.permute.xlu0 7
    %290 = vperm.xlu0 %289, %v153
    %v291 = vpop.permute.xlu0 %290
    %v293 = vlaneseq
    %v294 = vshrl.u32 %v293, 7
    %v295 = vsub.s32 7, %v294
    %v296 = vrot.slane %v154, %v295
    %v297 = vmin.f32 %v287, %v296
    %v298 = vmin.f32 %v291, %v296
    %299 = vset.pattern.permute.xlu0 5
    %300 = vperm.xlu0 %299, %v152
    %v301 = vpop.permute.xlu0 %300
    %303 = vset.pattern.permute.xlu0 5
    %304 = vperm.xlu0 %303, %v153
    %v305 = vpop.permute.xlu0 %304
    %v307 = vlaneseq
    %v308 = vshrl.u32 %v307, 7
    %v309 = vsub.s32 5, %v308
    %v310 = vrot.slane %v154, %v309
    %v311 = vmax.f32 %v301, %v310
    %v312 = vmax.f32 %v305, %v310
    %v313 = vsub.f32 %v297, %v311
    %v314 = vsub.f32 %v298, %v312
    %v315 = vmax.f32 %v313, 0.0
    %v316 = vmax.f32 %v314, 0.0
    %v317 = vmul.f32 %v283, %v315
    %v318 = vmul.f32 %v284, %v316
    %320 = vset.pattern.permute.xlu0 6
    %321 = vperm.xlu0 %320, %v243
    %v322 = vpop.permute.xlu0 %321
    %325 = vset.pattern.permute.xlu0 6
    %326 = vperm.xlu0 %325, %v244
    %v327 = vpop.permute.xlu0 %326
    %v329 = vlaneseq
    %v330 = vshrl.u32 %v329, 7
    %v331 = vsub.s32 6, %v330
    %v332 = vrot.slane %v252, %v331
    %v333 = vadd.f32 %v322, %v332
    %v334 = vadd.f32 %v327, %v332
    %v335 = vsub.f32 %v333, %v317
    %v336 = vsub.f32 %v334, %v318
    %v337 = vmax.f32 %v335, 1e-12
    %v338 = vmax.f32 %v336, 1e-12
    %v339 = vrcp.pop %v337
    %v340 = vrcp.pop %v338
    %v341 = vmul.f32 %v317, %v339
    %v342 = vmul.f32 %v318, %v340
    %v343 = vmax.f32 %v255, %v264
    %v344 = vmax.f32 %v259, %v264
    %v345 = vmin.f32 %v269, %v278
    %v346 = vmin.f32 %v273, %v278
    %v347 = vsub.f32 %v343, %v345
    %v348 = vsub.f32 %v344, %v346
    %v349 = vmax.f32 %v287, %v296
    %v350 = vmax.f32 %v291, %v296
    %v351 = vmin.f32 %v301, %v310
    %v352 = vmin.f32 %v305, %v310
    %v353 = vsub.f32 %v349, %v351
    %v354 = vsub.f32 %v350, %v352
    %v355 = vmul.f32 %v347, %v353
    %v356 = vmul.f32 %v348, %v354
    %v357 = vmax.f32 %v355, 1e-12
    %v358 = vmax.f32 %v356, 1e-12
    %v359 = vrcp.pop %v357
    %v360 = vrcp.pop %v358
    %v361 = vsub.f32 %v355, %v335
    %v362 = vsub.f32 %v356, %v336
    %v363 = vmul.f32 %v361, %v359
    %v364 = vmul.f32 %v362, %v360
    %v365 = vsub.f32 %v341, %v363
    %v366 = vsub.f32 %v342, %v364
    %v367 = vmul.f32 %v144, 2.0
    %v368 = vmul.f32 %v149, 2.0
    %v369 = vadd.f32 %v225, %v367
    %v370 = vadd.f32 %v226, %v368
    %v371 = vmul.f32 %v365, 2.0
    %v372 = vmul.f32 %v366, 2.0
    %v373 = vsub.f32 %v369, %v371
    %v374 = vsub.f32 %v370, %v372
    %375 = vst [vmem:[#allocation2] sm:$0xff] %v373
    %376 = vst [vmem:[#allocation2 + $0x8] sm:$0xff] %v374
    %v377 = vpack.c.bf16 %v149, %v144
    %v379 = vunpack.c.l.b16 %v377
    %v380 = vunpack.c.h.b16 %v377
    %v381 = vpack.c.b16 %v379, %v379
    %v382 = vpack.c.b16 %v380, %v380
    %385 = vst [vmem:[#allocation4] sm:$0xf] %v381
    %386 = vst [vmem:[#allocation4 + $0x4] sm:$0xf] %v382
    // Predicated region
    $region18: #{tpu_custom_call.1} parent=1 // pred_check
      _
    $region19: #{tpu_custom_call.1} parent=1 // pred_check_branch
      %388 = sbr.rel (0) target = $region21
    $region20: #{tpu_custom_call.1} parent=1 // pred_region
      %s390 = ssub.s32 256, 256
      %391 = vsyncadd [#allocation3], %s390
      %s392 = sshll.u32 [#allocation2], 4
      %s393 = int_to_ptr.vmem [resolvable:$true] %s392
      %398 = dma.vmem_to_hbm [thread:$0]  %s393, 256, %s4, [#allocation3], 128, 128, 8
    $region21: #{tpu_custom_call.1} parent=1 // pred_fallthru
      _
    // Predicated region
    $region22: #{tpu_custom_call.1} parent=1 // pred_check
      _
    $region23: #{tpu_custom_call.1} parent=1 // pred_check_branch
      %400 = sbr.rel (0) target = $region25
    $region24: #{tpu_custom_call.1} parent=1 // pred_region
      %s402 = ssub.s32 128, 128
      %403 = vsyncadd [#allocation5], %s402
      %s404 = sshll.u32 [#allocation4], 4
      %s405 = int_to_ptr.vmem [resolvable:$true] %s404
      %410 = dma.vmem_to_hbm [thread:$0]  %s405, 128, %s5, [#allocation5], 64, 64, 4
    $region25: #{tpu_custom_call.1} parent=1 // pred_fallthru
      _
    // Predicated region
    $region26: #{tpu_custom_call.1} parent=1 // pred_check
      _
    $region27: #{tpu_custom_call.1} parent=1 // pred_check_branch
      %412 = sbr.rel (0) target = $region29
    $region28: #{tpu_custom_call.1} parent=1 // pred_region
      %413 = dma.done [#allocation3], 256
    $region29: #{tpu_custom_call.1} parent=1 // pred_fallthru
      _
    // Predicated region
    $region30: #{tpu_custom_call.1} parent=1 // pred_check
      _
    $region31: #{tpu_custom_call.1} parent=1 // pred_check_branch
      %415 = sbr.rel (0) target = $region33
    $region32: #{tpu_custom_call.1} parent=1 // pred_region
      %416 = dma.done [#allocation5], 128
    $region33: #{tpu_custom_call.1} parent=1 // pred_fallthru
      _
    %417 = vsyncpa [#allocation3], 1
    %418 = vsyncpa [#allocation5], 1

// kernel: tpu_custom_call.1
$region0: #{tpu_custom_call.1}
  #allocation0 [shape = 'u32[]', space=smem, size = 0x4, offset = 0x4, fixed_abs, tag = 'smem constant byte address 0x4 - core index']
  #allocation1 [shape = 'u32[144,128]{1,0:T(1,128)}', space=vmem, size = 0x12000, scoped, tag = 'internal scratch']
  %s0 = inlined_call_operand.vmem [shape: f32[16,8], index: 0, kind: input, shape index: {}]
  %s1 = inlined_call_operand.vmem [shape: f32[16,8], index: 1, kind: input, shape index: {}]
  %s2 = inlined_call_operand.vmem [shape: f32[8,128], index: 2, kind: input, shape index: {}]
  %s3 = inlined_call_operand.vmem [shape: f32[8,128], index: 3, kind: input, shape index: {}]
  %s4 = inlined_call_operand.hbm [shape: f32[16,128], index: 4, kind: output, shape index: {0}]
  %s5 = inlined_call_operand.hbm [shape: bf16[16,128], index: 5, kind: output, shape index: {1}]
  %6 = xla_tuple %s4, %s5
  %s7 = sld [smem:[#allocation0]]
  $region34: #{tpu_custom_call.1} parent=0
    _
  %s9 = ssub.s32 1, %s7
  %s10 = scalar_select 0, %s9, %s7
  $region1: #{tpu_custom_call.1} parent=0
    #allocation2 [shape = 'u8[8192]{0}', space=vmem, size = 0x2000, scoped, tag = 'output window, operand 0, single buffered']
    #allocation3 [shape = 's32[1]{0}', space=sflag, size = 0x4, scoped, tag = 'scoped memory for tpu_custom_call.1']
    #allocation4 [shape = 'u8[4096]{0}', space=vmem, size = 0x1000, scoped, tag = 'output window, operand 1, single buffered']
    #allocation5 [shape = 's32[1]{0}', space=sflag, size = 0x4, scoped, tag = 'scoped memory for tpu_custom_call.1']
    %11 = vsyncpa [#allocation3], 0
    %12 = vsyncpa [#allocation5], 0
    // Predicated region
    $region2: #{tpu_custom_call.1} parent=1 // pred_check
      _
    $region3: #{tpu_custom_call.1} parent=1 // pred_check_branch
      %14 = sbr.rel (0) target = $region5
    $region4: #{tpu_custom_call.1} parent=1 // pred_region
      _
    $region5: #{tpu_custom_call.1} parent=1 // pred_fallthru
      _
    // Predicated region
    $region6: #{tpu_custom_call.1} parent=1 // pred_check
      _
    $region7: #{tpu_custom_call.1} parent=1 // pred_check_branch
      %16 = sbr.rel (0) target = $region9
    $region8: #{tpu_custom_call.1} parent=1 // pred_region
      _
    $region9: #{tpu_custom_call.1} parent=1 // pred_fallthru
      _
    // Predicated region
    $region10: #{tpu_custom_call.1} parent=1 // pred_check
      _
    $region11: #{tpu_custom_call.1} parent=1 // pred_check_branch
      %18 = sbr.rel (0) target = $region13
    $region12: #{tpu_custom_call.1} parent=1 // pred_region
      _
    $region13: #{tpu_custom_call.1} parent=1 // pred_fallthru
      _
    // Predicated region
    $region14: #{tpu_custom_call.1} parent=1 // pred_check
      _
    $region15: #{tpu_custom_call.1} parent=1 // pred_check_branch
      %20 = sbr.rel (0) target = $region17
    $region16: #{tpu_custom_call.1} parent=1 // pred_region
      _
    $region17: #{tpu_custom_call.1} parent=1 // pred_fallthru
      _
    %v21 = vld [vmem:[%s0] sm:$0xff]
    %v22 = vld [vmem:[%s0 + $0x8] sm:$0xff]
    %v23 = vand.u32 2147483647, %v21
    %v24 = vand.u32 2147483647, %v22
    %v25 = vsub.f32 0.0, %v23
    %v26 = vsub.f32 0.0, %v24
    %v27 = vmul.f32 %v25, 1.442695
    %v28 = vpow.pop %v27
    %v29 = vmul.f32 %v26, 1.442695
    %v30 = vpow.pop %v29
    %v31 = vadd.f32 %v28, 1.0
    %v32 = vadd.f32 %v30, 1.0
    %v33 = vrcp.pop %v31
    %v34 = vmul.f32 1.0, %v33
    %v35 = vrcp.pop %v32
    %v36 = vmul.f32 1.0, %v35
    %vm37 = vcmp.ge.f32.partialorder %v21, 0.0
    %vm38 = vcmp.ge.f32.partialorder %v22, 0.0
    %v39 = vmul.f32 %v28, %v34
    %v40 = vmul.f32 %v30, %v36
    %v41 = vsel %vm37, %v34, %v39
    %v42 = vsel %vm38, %v36, %v40
    %v43 = vmax.f32 %v21, 0.0
    %v44 = vmax.f32 %v22, 0.0
    %v45 = vlog2.pop %v31
    %v46 = vmul.f32 %v45, 0.6931472
    %v47 = vlog2.pop %v32
    %v48 = vmul.f32 %v47, 0.6931472
    %v49 = vadd.f32 %v43, %v46
    %v50 = vadd.f32 %v44, %v48
    %v51 = vsub.f32 %v49, %v21
    %v52 = vsub.f32 %v50, %v22
    %v53 = vsub.f32 1.0, %v41
    %v54 = vsub.f32 1.0, %v42
    %v55 = vmul.f32 %v53, %v53
    %v56 = vmul.f32 %v54, %v54
    %v57 = vmul.f32 %v41, %v41
    %v58 = vmul.f32 %v42, %v42
    %v59 = vmul.f32 %v55, 0.25
    %v60 = vmul.f32 %v56, 0.25
    %v61 = vmul.f32 %v59, %v51
    %v62 = vmul.f32 %v60, %v52
    %v63 = vmul.f32 %v57, 0.75
    %v64 = vmul.f32 %v58, 0.75
    %v65 = vmul.f32 %v63, %v49
    %v66 = vmul.f32 %v64, %v50
    %v67 = vsub.f32 %v61, %v65
    %v68 = vsub.f32 %v62, %v66
    %v69 = vld [vmem:[%s2] sm:$0xff]
    %vm70 = vcmask 64512
    %v72 = vsel %vm70, %v67, 0
    %v75 = vsel %vm70, %v68, 0
    %77 = vmatprep.subr.mxu0 0.0
    %78 = vmatpush1.msra.mxu0 %v69
    %79 = vmatprep.subr.mxu0 0.0
    %80 = vmatpush1.msra.mxu0 0.0
    %81 = vmatprep.subr.mxu0 0.0
    %82 = vmatpush1.msra.mxu0 0.0
    %83 = vmatprep.subr.mxu0 0.0
    %84 = vmatpush1.msra.mxu0 0.0
    %85 = vmatprep.subr.mxu0 0.0
    %86 = vmatpush1.msra.mxu0 0.0
    %87 = vmatprep.subr.mxu0 0.0
    %88 = vmatpush1.msra.mxu0 0.0
    %89 = vmatprep.subr.mxu0 0.0
    %90 = vmatpush1.msra.mxu0 0.0
    %91 = vmatprep.subr.mxu0 0.0
    %92 = vmatpush1.msra.mxu0 0.0
    %93 = vmatprep.subr.mxu0 0.0
    %94 = vmatpush1.msra.mxu0 0.0
    %95 = vmatprep.subr.mxu0 0.0
    %96 = vmatpush1.msra.mxu0 0.0
    %97 = vmatprep.subr.mxu0 0.0
    %98 = vmatpush1.msra.mxu0 0.0
    %99 = vmatprep.subr.mxu0 0.0
    %100 = vmatpush1.msra.mxu0 0.0
    %101 = vmatprep.subr.mxu0 0.0
    %102 = vmatpush1.msra.mxu0 0.0
    %103 = vmatprep.subr.mxu0 0.0
    %104 = vmatpush1.msra.mxu0 0.0
    %105 = vmatprep.subr.mxu0 0.0
    %106 = vmatpush1.msra.mxu0 0.0
    %107 = vmatprep.subr.mxu0 0.0
    %108 = vmatpush1.msra.mxu0 0.0
    %109 = vmatprep.subr.mxu0 0.0
    %110 = vmatpush1.msra.mxu0 0.0
    %111 = vmatprep.subr.mxu0 0.0
    %112 = vmatpush1.msra.mxu0 0.0
    %113 = vmatprep.subr.mxu0 0.0
    %114 = vmatpush1.msra.mxu0 0.0
    %115 = vmatprep.subr.mxu0 0.0
    %116 = vmatpush1.msra.mxu0 0.0
    %117 = vmatprep.subr.mxu0 0.0
    %118 = vmatpush1.msra.mxu0 0.0
    %119 = vmatprep.subr.mxu0 0.0
    %120 = vmatpush1.msra.mxu0 0.0
    %121 = vmatprep.subr.mxu0 0.0
    %122 = vmatpush1.msra.mxu0 0.0
    %123 = vmatprep.subr.mxu0 0.0
    %124 = vmatpush1.msra.mxu0 0.0
    %125 = vmatprep.subr.mxu0 0.0
    %126 = vmatpush1.msra.mxu0 0.0
    %127 = vmatprep.subr.mxu0 0.0
    %128 = vmatpush1.msra.mxu0 0.0
    %129 = vmatprep.subr.mxu0 0.0
    %130 = vmatpush1.msra.mxu0 0.0
    %131 = vmatprep.subr.mxu0 0.0
    %132 = vmatpush1.msra.mxu0 0.0
    %133 = vmatprep.subr.mxu0 0.0
    %134 = vmatpush1.msra.mxu0 0.0
    %135 = vmatprep.subr.mxu0 0.0
    %136 = vmatpush1.msra.mxu0 0.0
    %137 = vmatprep.subr.mxu0 0.0
    %138 = vmatpush1.msra.mxu0 0.0
    %139 = vmatprep.subr.mxu0 0.0
    %140 = vmatpush1.msra.mxu0 0.0
    %141 = vmatprep.mubr.f32.mxu0 0.0
    %142 = vmatmul.mubr.f32.gmra.mrb[0].mxu0 %v72
    %v143 = vpop.f32.mrb[0].mxu0
    %v144 = vadd.f32 0.0, %v143
    %v145 = vpop.f32.mrb[0].mxu0
    %146 = vmatprep.mubr.f32.mxu0 0.0
    %147 = vmatmul.mubr.f32.gmra.mrb[0].mxu0 %v75
    %v148 = vpop.f32.mrb[0].mxu0
    %v149 = vadd.f32 0.0, %v148
    %v150 = vpop.f32.mrb[0].mxu0
    %151 = vdwg.mxu0
    %v152 = vld [vmem:[%s1] sm:$0xff]
    %v153 = vld [vmem:[%s1 + $0x8] sm:$0xff]
    %v154 = vld [vmem:[%s3] sm:$0xff]
    %156 = vset.pattern.permute.xlu0 0
    %157 = vperm.xlu0 %156, %v152
    %v158 = vpop.permute.xlu0 %157
    %161 = vset.pattern.permute.xlu0 0
    %162 = vperm.xlu0 %161, %v153
    %v163 = vpop.permute.xlu0 %162
    %v165 = vlaneseq
    %v166 = vshrl.u32 %v165, 7
    %v167 = vsub.s32 0, %v166
    %v168 = vrot.slane %v154, %v167
    %v169 = vsub.f32 %v158, %v168
    %v170 = vsub.f32 %v163, %v168
    %v171 = vand.u32 2147483647, %v169
    %v172 = vand.u32 2147483647, %v170
    %173 = vset.pattern.permute.xlu0 1
    %174 = vperm.xlu0 %173, %v152
    %v175 = vpop.permute.xlu0 %174
    %177 = vset.pattern.permute.xlu0 1
    %178 = vperm.xlu0 %177, %v153
    %v179 = vpop.permute.xlu0 %178
    %v181 = vlaneseq
    %v182 = vshrl.u32 %v181, 7
    %v183 = vsub.s32 1, %v182
    %v184 = vrot.slane %v154, %v183
    %v185 = vsub.f32 %v175, %v184
    %v186 = vsub.f32 %v179, %v184
    %v187 = vand.u32 2147483647, %v185
    %v188 = vand.u32 2147483647, %v186
    %v189 = vadd.f32 %v171, %v187
    %v190 = vadd.f32 %v172, %v188
    %191 = vset.pattern.permute.xlu0 2
    %192 = vperm.xlu0 %191, %v152
    %v193 = vpop.permute.xlu0 %192
    %195 = vset.pattern.permute.xlu0 2
    %196 = vperm.xlu0 %195, %v153
    %v197 = vpop.permute.xlu0 %196
    %v199 = vlaneseq
    %v200 = vshrl.u32 %v199, 7
    %v201 = vsub.s32 2, %v200
    %v202 = vrot.slane %v154, %v201
    %v203 = vsub.f32 %v193, %v202
    %v204 = vsub.f32 %v197, %v202
    %v205 = vand.u32 2147483647, %v203
    %v206 = vand.u32 2147483647, %v204
    %v207 = vadd.f32 %v189, %v205
    %v208 = vadd.f32 %v190, %v206
    %209 = vset.pattern.permute.xlu0 3
    %210 = vperm.xlu0 %209, %v152
    %v211 = vpop.permute.xlu0 %210
    %213 = vset.pattern.permute.xlu0 3
    %214 = vperm.xlu0 %213, %v153
    %v215 = vpop.permute.xlu0 %214
    %v217 = vlaneseq
    %v218 = vshrl.u32 %v217, 7
    %v219 = vsub.s32 3, %v218
    %v220 = vrot.slane %v154, %v219
    %v221 = vsub.f32 %v211, %v220
    %v222 = vsub.f32 %v215, %v220
    %v223 = vand.u32 2147483647, %v221
    %v224 = vand.u32 2147483647, %v222
    %v225 = vadd.f32 %v207, %v223
    %v226 = vadd.f32 %v208, %v224
    %227 = vrot.lane.b32.xlu0 %v152, 2
    %v228 = vpop.permute.xlu0 %227
    %229 = vrot.lane.b32.xlu0 %v153, 2
    %v230 = vpop.permute.xlu0 %229
    %v233 = vsub.f32 %v152, %v228
    %v234 = vsub.f32 %v153, %v230
    %237 = vrot.lane.b32.xlu0 %v233, 127
    %v238 = vpop.permute.xlu0 %237
    %239 = vrot.lane.b32.xlu0 %v234, 127
    %v240 = vpop.permute.xlu0 %239
    %v243 = vmul.f32 %v233, %v238
    %v244 = vmul.f32 %v234, %v240
    %v246 = vrot.slane %v154, 6
    %v248 = vsub.f32 %v154, %v246
    %v250 = vrot.slane %v248, 1
    %v252 = vmul.f32 %v248, %v250
    %253 = vset.pattern.permute.xlu0 6
    %254 = vperm.xlu0 %253, %v152
    %v255 = vpop.permute.xlu0 %254
    %257 = vset.pattern.permute.xlu0 6
    %258 = vperm.xlu0 %257, %v153
    %v259 = vpop.permute.xlu0 %258
    %v261 = vlaneseq
    %v262 = vshrl.u32 %v261, 7
    %v263 = vsub.s32 6, %v262
    %v264 = vrot.slane %v154, %v263
    %v265 = vmin.f32 %v255, %v264
    %v266 = vmin.f32 %v259, %v264
    %267 = vset.pattern.permute.xlu0 4
    %268 = vperm.xlu0 %267, %v152
    %v269 = vpop.permute.xlu0 %268
    %271 = vset.pattern.permute.xlu0 4
    %272 = vperm.xlu0 %271, %v153
    %v273 = vpop.permute.xlu0 %272
    %v275 = vlaneseq
    %v276 = vshrl.u32 %v275, 7
    %v277 = vsub.s32 4, %v276
    %v278 = vrot.slane %v154, %v277
    %v279 = vmax.f32 %v269, %v278
    %v280 = vmax.f32 %v273, %v278
    %v281 = vsub.f32 %v265, %v279
    %v282 = vsub.f32 %v266, %v280
    %v283 = vmax.f32 %v281, 0.0
    %v284 = vmax.f32 %v282, 0.0
    %285 = vset.pattern.permute.xlu0 7
    %286 = vperm.xlu0 %285, %v152
    %v287 = vpop.permute.xlu0 %286
    %289 = vset.pattern.permute.xlu0 7
    %290 = vperm.xlu0 %289, %v153
    %v291 = vpop.permute.xlu0 %290
    %v293 = vlaneseq
    %v294 = vshrl.u32 %v293, 7
    %v295 = vsub.s32 7, %v294
    %v296 = vrot.slane %v154, %v295
    %v297 = vmin.f32 %v287, %v296
    %v298 = vmin.f32 %v291, %v296
    %299 = vset.pattern.permute.xlu0 5
    %300 = vperm.xlu0 %299, %v152
    %v301 = vpop.permute.xlu0 %300
    %303 = vset.pattern.permute.xlu0 5
    %304 = vperm.xlu0 %303, %v153
    %v305 = vpop.permute.xlu0 %304
    %v307 = vlaneseq
    %v308 = vshrl.u32 %v307, 7
    %v309 = vsub.s32 5, %v308
    %v310 = vrot.slane %v154, %v309
    %v311 = vmax.f32 %v301, %v310
    %v312 = vmax.f32 %v305, %v310
    %v313 = vsub.f32 %v297, %v311
    %v314 = vsub.f32 %v298, %v312
    %v315 = vmax.f32 %v313, 0.0
    %v316 = vmax.f32 %v314, 0.0
    %v317 = vmul.f32 %v283, %v315
    %v318 = vmul.f32 %v284, %v316
    %320 = vset.pattern.permute.xlu0 6
    %321 = vperm.xlu0 %320, %v243
    %v322 = vpop.permute.xlu0 %321
    %325 = vset.pattern.permute.xlu0 6
    %326 = vperm.xlu0 %325, %v244
    %v327 = vpop.permute.xlu0 %326
    %v329 = vlaneseq
    %v330 = vshrl.u32 %v329, 7
    %v331 = vsub.s32 6, %v330
    %v332 = vrot.slane %v252, %v331
    %v333 = vadd.f32 %v322, %v332
    %v334 = vadd.f32 %v327, %v332
    %v335 = vsub.f32 %v333, %v317
    %v336 = vsub.f32 %v334, %v318
    %v337 = vmax.f32 %v335, 1e-12
    %v338 = vmax.f32 %v336, 1e-12
    %v339 = vrcp.pop %v337
    %v340 = vrcp.pop %v338
    %v341 = vmul.f32 %v317, %v339
    %v342 = vmul.f32 %v318, %v340
    %v343 = vmax.f32 %v255, %v264
    %v344 = vmax.f32 %v259, %v264
    %v345 = vmin.f32 %v269, %v278
    %v346 = vmin.f32 %v273, %v278
    %v347 = vsub.f32 %v343, %v345
    %v348 = vsub.f32 %v344, %v346
    %v349 = vmax.f32 %v287, %v296
    %v350 = vmax.f32 %v291, %v296
    %v351 = vmin.f32 %v301, %v310
    %v352 = vmin.f32 %v305, %v310
    %v353 = vsub.f32 %v349, %v351
    %v354 = vsub.f32 %v350, %v352
    %v355 = vmul.f32 %v347, %v353
    %v356 = vmul.f32 %v348, %v354
    %v357 = vmax.f32 %v355, 1e-12
    %v358 = vmax.f32 %v356, 1e-12
    %v359 = vrcp.pop %v357
    %v360 = vrcp.pop %v358
    %v361 = vsub.f32 %v355, %v335
    %v362 = vsub.f32 %v356, %v336
    %v363 = vmul.f32 %v361, %v359
    %v364 = vmul.f32 %v362, %v360
    %v365 = vsub.f32 %v341, %v363
    %v366 = vsub.f32 %v342, %v364
    %v367 = vmul.f32 %v144, 2.0
    %v368 = vmul.f32 %v149, 2.0
    %v369 = vadd.f32 %v225, %v367
    %v370 = vadd.f32 %v226, %v368
    %v371 = vmul.f32 %v365, 2.0
    %v372 = vmul.f32 %v366, 2.0
    %v373 = vsub.f32 %v369, %v371
    %v374 = vsub.f32 %v370, %v372
    %375 = vst [vmem:[#allocation2] sm:$0xff] %v373
    %376 = vst [vmem:[#allocation2 + $0x8] sm:$0xff] %v374
    %v377 = vpack.c.bf16 %v149, %v144
    %v379 = vunpack.c.l.b16 %v377
    %v380 = vunpack.c.h.b16 %v377
    %v381 = vpack.c.b16 %v379, %v379
    %v382 = vpack.c.b16 %v380, %v380
    %385 = vst [vmem:[#allocation4] sm:$0xf] %v381
    %386 = vst [vmem:[#allocation4 + $0x4] sm:$0xf] %v382
    // Predicated region
    $region18: #{tpu_custom_call.1} parent=1 // pred_check
      _
    $region19: #{tpu_custom_call.1} parent=1 // pred_check_branch
      %388 = sbr.rel (0) target = $region21
    $region20: #{tpu_custom_call.1} parent=1 // pred_region
      %s390 = ssub.s32 256, 256
      %391 = vsyncadd [#allocation3], %s390
      %s392 = sshll.u32 [#allocation2], 4
      %s393 = int_to_ptr.vmem [resolvable:$true] %s392
      %398 = dma.vmem_to_hbm [thread:$0]  %s393, 256, %s4, [#allocation3], 128, 128, 8
    $region21: #{tpu_custom_call.1} parent=1 // pred_fallthru
      _
    // Predicated region
    $region22: #{tpu_custom_call.1} parent=1 // pred_check
      _
    $region23: #{tpu_custom_call.1} parent=1 // pred_check_branch
      %400 = sbr.rel (0) target = $region25
    $region24: #{tpu_custom_call.1} parent=1 // pred_region
      %s402 = ssub.s32 128, 128
      %403 = vsyncadd [#allocation5], %s402
      %s404 = sshll.u32 [#allocation4], 4
      %s405 = int_to_ptr.vmem [resolvable:$true] %s404
      %410 = dma.vmem_to_hbm [thread:$0]  %s405, 128, %s5, [#allocation5], 64, 64, 4
    $region25: #{tpu_custom_call.1} parent=1 // pred_fallthru
      _
    // Predicated region
    $region26: #{tpu_custom_call.1} parent=1 // pred_check
      _
    $region27: #{tpu_custom_call.1} parent=1 // pred_check_branch
      %412 = sbr.rel (0) target = $region29
    $region28: #{tpu_custom_call.1} parent=1 // pred_region
      %413 = dma.done [#allocation3], 256
    $region29: #{tpu_custom_call.1} parent=1 // pred_fallthru
      _
    // Predicated region
    $region30: #{tpu_custom_call.1} parent=1 // pred_check
      _
    $region31: #{tpu_custom_call.1} parent=1 // pred_check_branch
      %415 = sbr.rel (0) target = $region33
    $region32: #{tpu_custom_call.1} parent=1 // pred_region
      %416 = dma.done [#allocation5], 128
    $region33: #{tpu_custom_call.1} parent=1 // pred_fallthru
      _
    %417 = vsyncpa [#allocation3], 1
    %418 = vsyncpa [#allocation5], 1

</llo_original>
